<compile_context>
chip_gen: v5e
topology: v5e:2x2
jax: 0.10.0
libtpu: 0.0.40
codegen_flags: <defaults>
</compile_context>

<pallas_src>
import functools

import jax
import jax.numpy as jnp
import numpy as np
from jax import lax
from jax.experimental import pallas as pl
from jax.experimental.pallas import tpu as pltpu

ALPHA = 0.2      # LeakyReLU negative slope (module default)
LANE = 128


def _round_up(x, m):
    return (x + m - 1) // m * m


def _conv_lrelu_kernel(x_ref, w_ref, b_ref, o_ref, *, th, wo_pad, kh_n, nw2,
                       stride, alpha):
    """One (batch, output-row-tile) step of the fused conv + LeakyReLU.

    x_ref : (Hp2, stride, Wp2, stride*Cin)  phase-split padded image (VMEM resident)
    w_ref : (kh_n*nw2, stride*Cin, Cout)    per-tap weights (zero-padded over kw)
    b_ref : (1, Cout)                       bias, f32
    o_ref : (th*wo_pad, Cout)               output tile
    """
    h0 = pl.program_id(1) * th
    cl = x_ref.shape[-1]
    cout = o_ref.shape[-1]

    acc = jnp.zeros((th * wo_pad, cout), jnp.float32)
    for kh in range(kh_n):
        # All output rows of this tile at kernel-row kh live in row-phase kh % stride,
        # coarse rows [h0 + kh//stride, h0 + kh//stride + th): unstrided dynamic slice.
        strip = x_ref[pl.ds(h0 + kh // stride, th), kh % stride, :, :]
        for w2 in range(nw2):
            # Shifted window over the coarse-width axis; full stride*Cin lanes.
            tap = strip[:, w2:w2 + wo_pad, :].reshape(th * wo_pad, cl)
            acc = acc + jnp.dot(tap, w_ref[kh * nw2 + w2],
                                preferred_element_type=jnp.float32)

    acc = acc + b_ref[...]                       # bias (f32)
    acc = jnp.where(acc >= 0, acc, alpha * acc)  # LeakyReLU epilogue (VPU)
    o_ref[...] = acc.astype(o_ref.dtype)


def conv_base_block(x, w_hwio, bias, *, stride=2, padding=None, alpha=ALPHA,
                    use_bf16=True, out_dtype=None, rows_per_tile=None,
                    data_format="NCHW"):
    """Forward of ConvBaseBlock: Conv2d(stride, padding) -> LeakyReLU(alpha)."""
    if data_format == "NCHW":
        N, Cin, H, W = x.shape
        x_nhwc = jnp.transpose(x, (0, 2, 3, 1))
    elif data_format == "NHWC":
        N, H, W, Cin = x.shape
        x_nhwc = x
    else:
        raise ValueError(f"unknown data_format {data_format!r}")

    KH, KW, Cin_w, Cout = w_hwio.shape
    assert Cin_w == Cin
    if padding is None:
        padding = KH // 2
    Ho = (H + 2 * padding - KH) // stride + 1
    Wo = (W + 2 * padding - KW) // stride + 1

    gemm_dtype = jnp.bfloat16 if use_bf16 else x.dtype
    out_dtype = x.dtype if out_dtype is None else out_dtype
    gsz = jnp.dtype(gemm_dtype).itemsize
    osz = jnp.dtype(out_dtype).itemsize
    sub_in = 8 if gsz >= 4 else (16 if gsz == 2 else 32)
    sub_out = 8 if osz >= 4 else (16 if osz == 2 else 32)

    # Pad Wo so the in-kernel (th, Wo_pad, CL) -> (th*Wo_pad, CL) collapse is
    # layout-trivial (no sublane padding inside the tile).
    Wo_pad = _round_up(Wo, sub_in)
    kh_off = (KH - 1) // stride
    kw_off = (KW - 1) // stride
    nw2 = kw_off + 1                 # width taps per kernel row (kw grouped by phase)
    Wp2 = Wo_pad + kw_off            # coarse (phase-split) padded width
    CL = stride * Cin                # lane dim of the phase-split input

    # ---- generation-aware VMEM budget (v5e/v6e: 128 MiB, v7x: 64 MiB per core) ----
    try:
        vmem_cap = int(pltpu.get_tpu_info().vmem_capacity_bytes)
    except Exception:
        vmem_cap = 64 * 1024 * 1024
    vmem_limit = min(vmem_cap * 3 // 4, 100 * 1024 * 1024)
    budget = int(vmem_limit * 0.7)

    cout_l = _round_up(Cout, LANE)
    cl_l = _round_up(CL, LANE)
    wp2_s = _round_up(Wp2, sub_in)
    w_bytes = 2 * KH * nw2 * _round_up(CL, sub_in) * cout_l * gsz
    b_bytes = 2 * 8 * cout_l * 4

    def vmem_estimate(th, ho_pad):
        hp2 = ho_pad + kh_off
        img = 2 * hp2 * stride * wp2_s * cl_l * gsz        # resident input (dbl-buffered)
        m = th * Wo_pad
        out_blk = 2 * _round_up(m, sub_out) * cout_l * osz  # output tile (dbl-buffered)
        acc = m * cout_l * 4                                # in-kernel f32 accumulator
        strip = 2 * th * wp2_s * cl_l * gsz                 # strip value + headroom
        taps = 3 * m * LANE * 4                             # tap / cast / dot temporaries
        return img + out_blk + acc + strip + taps + w_bytes + b_bytes

    # ---- output rows per grid step (as large as the VMEM budget allows) ----
    if rows_per_tile is not None:
        TH = max(1, min(int(rows_per_tile), Ho))
    else:
        TH = min(Ho, max(8, 8192 // Wo_pad))
        while TH > 8 and vmem_estimate(TH, _round_up(Ho, TH)) > budget:
            TH -= 8
        TH = max(1, min(TH, Ho))
    Ho_pad = _round_up(Ho, TH)
    R = Ho_pad // TH
    Hp2 = Ho_pad + kh_off

    # ---- build padded + phase-split input (free row-major reshape, no extra pass) ----
    Hp_ext = Hp2 * stride
    Wp_ext = Wp2 * stride
    pad_b = Hp_ext - padding - H
    pad_r = Wp_ext - padding - W
    assert pad_b >= 0 and pad_r >= 0, "padding/stride combination not supported"
    xp = jnp.pad(x_nhwc, ((0, 0), (padding, pad_b), (padding, pad_r), (0, 0)))
    xpr = xp.reshape(N, Hp2, stride, Wp2, CL).astype(gemm_dtype)

    # Weights grouped by coarse-kw tap: (KH*nw2, stride*Cin, Cout); kw positions past
    # KW are zero so the extra phase column they touch contributes nothing.
    w_pad_kw = jnp.pad(w_hwio, ((0, 0), (0, nw2 * stride - KW), (0, 0), (0, 0)))
    w_taps = w_pad_kw.reshape(KH, nw2, CL, Cout).reshape(KH * nw2, CL, Cout)
    w_taps = w_taps.astype(gemm_dtype)
    b2 = bias.reshape(1, Cout).astype(jnp.float32)

    kernel = functools.partial(_conv_lrelu_kernel, th=TH, wo_pad=Wo_pad, kh_n=KH,
                               nw2=nw2, stride=stride, alpha=alpha)
    cost = pl.CostEstimate(
        flops=int(2 * N * Ho_pad * Wo_pad * KH * nw2 * CL * Cout),
        transcendentals=0,
        bytes_accessed=int(xpr.size * gsz + w_taps.size * gsz
                           + N * Ho_pad * Wo_pad * Cout * osz),
    )

    out_flat = pl.pallas_call(
        kernel,
        out_shape=jax.ShapeDtypeStruct((N, Ho_pad * Wo_pad, Cout), out_dtype),
        grid=(N, R),
        in_specs=[
            # whole padded image of batch n, resident across all row tiles (read once)
            pl.BlockSpec((None, Hp2, stride, Wp2, CL), lambda n, r: (n, 0, 0, 0, 0)),
            pl.BlockSpec((KH * nw2, CL, Cout), lambda n, r: (0, 0, 0)),
            pl.BlockSpec((1, Cout), lambda n, r: (0, 0)),
        ],
        out_specs=pl.BlockSpec((None, TH * Wo_pad, Cout), lambda n, r: (n, r, 0)),
        compiler_params=pltpu.CompilerParams(
            dimension_semantics=("parallel", "arbitrary"),
            vmem_limit_bytes=int(vmem_limit),
        ),
        cost_estimate=cost,
    )(xpr, w_taps, b2)

    y = out_flat.reshape(N, Ho_pad, Wo_pad, Cout)[:, :Ho, :Wo, :]
    if data_format == "NCHW":
        y = jnp.transpose(y, (0, 3, 1, 2))
    return y


def _reference(x_nchw, w_hwio, bias, *, stride=2, padding=1, alpha=ALPHA):
    x_nhwc = jnp.transpose(x_nchw, (0, 2, 3, 1))
    y = lax.conv_general_dilated(
        x_nhwc, w_hwio,
        window_strides=(stride, stride),
        padding=[(padding, padding), (padding, padding)],
        dimension_numbers=("NHWC", "HWIO", "NHWC"))
    y = y + bias[None, None, None, :]
    y = jnp.where(y >= 0, y, alpha * y)
    return jnp.transpose(y, (0, 3, 1, 2))


if __name__ == "__main__":
    # Shapes consistent with the module: N=2, Cin=4, H=W=16, Cout=8, k=3, stride=2
    N, Cin, H, W = 2, 4, 16, 16
    Cout, K, stride = 8, 3, 2
    padding = K // 2

    key = jax.random.PRNGKey(0)
    kx, kw, kb, kx2 = jax.random.split(key, 4)

    x = jax.random.normal(kx, (N, Cin, H, W), dtype=jnp.float32)
    fan_in = Cin * K * K
    bound = 1.0 / np.sqrt(fan_in)
    w_hwio = jax.random.uniform(kw, (K, K, Cin, Cout), minval=-bound, maxval=bound,
                                dtype=jnp.float32)
    bias = jax.random.uniform(kb, (Cout,), minval=-bound, maxval=bound,
                              dtype=jnp.float32)

    y_ref = _reference(x, w_hwio, bias, stride=stride, padding=padding)

    # 1) default path: fused conv, bf16 MXU feed + f32 accumulation (loose tolerance)
    y = jax.block_until_ready(
        conv_base_block(x, w_hwio, bias, stride=stride, padding=padding))
    assert y.shape == (N, Cout, H // stride, W // stride)
    np.testing.assert_allclose(np.asarray(y), np.asarray(y_ref), rtol=5e-2, atol=3e-2)

    # 2) exact f32 path, tight tolerance
    y32 = jax.block_until_ready(
        conv_base_block(x, w_hwio, bias, stride=stride, padding=padding,
                        use_bf16=False))
    np.testing.assert_allclose(np.asarray(y32), np.asarray(y_ref), rtol=1e-5, atol=1e-5)

    # 3) larger spatial + forced multi-row-tile grid (exercises dynamic row-tile slicing
    #    and the resident-input reuse across row tiles)
    x2 = jax.random.normal(kx2, (N, Cin, 32, 32), dtype=jnp.float32)
    y2 = jax.block_until_ready(
        conv_base_block(x2, w_hwio, bias, stride=stride, padding=padding,
                        use_bf16=False, rows_per_tile=4))
    y2_ref = _reference(x2, w_hwio, bias, stride=stride, padding=padding)
    np.testing.assert_allclose(np.asarray(y2), np.asarray(y2_ref), rtol=1e-5, atol=1e-5)

    # 4) NHWC-in / NHWC-out variant (skips the boundary transposes when chaining blocks)
    x_nhwc = jnp.transpose(x, (0, 2, 3, 1))
    y4 = jax.block_until_ready(
        conv_base_block(x_nhwc, w_hwio, bias, stride=stride, padding=padding,
                        use_bf16=False, data_format="NHWC"))
    np.testing.assert_allclose(np.asarray(jnp.transpose(y4, (0, 3, 1, 2))),
                               np.asarray(y_ref), rtol=1e-5, atol=1e-5)

    print("KERNEL_OK")
</pallas_src>

<mosaic_0001>
module attributes {stable_mosaic.version = 11 : i64} {
  func.func @_conv_lrelu_kernel(%arg0: i32, %arg1: i32, %arg2: memref<1x9x2x17x8xbf16, #tpu.memory_space<vmem>>, %arg3: memref<6x8x8xbf16, #tpu.memory_space<vmem>>, %arg4: memref<1x8xf32, #tpu.memory_space<vmem>>, %arg5: memref<1x128x8xf32, #tpu.memory_space<vmem>>) attributes {dimension_semantics = [#tpu.dimension_semantics<parallel>, #tpu.dimension_semantics<arbitrary>], iteration_bounds = array<i64: 2, 1>, scalar_prefetch = 0 : i64, scratch_operands = 0 : i64, tpu.core_type = #tpu.core_type<tc>, window_params = [{transform_indices = @transform_0, window_bounds = array<i64: 1, 9, 2, 17, 8>}, {pipeline_mode = #tpu.pipeline_mode<synchronous>, transform_indices = @transform_1, window_bounds = array<i64: 6, 8, 8>}, {pipeline_mode = #tpu.pipeline_mode<synchronous>, transform_indices = @transform_2, window_bounds = array<i64: 1, 8>}, {transform_indices = @transform_3, window_bounds = array<i64: 1, 128, 8>}]} {
    %c8_i32 = arith.constant 8 : i32
    %0 = arith.muli %arg1, %c8_i32 : i32
    %cst = arith.constant 0.000000e+00 : f32
    %1 = vector.broadcast %cst : f32 to vector<128x8xf32>
    %c0_i32 = arith.constant 0 : i32
    %2 = arith.addi %0, %c0_i32 : i32
    %c0 = arith.constant 0 : index
    %3 = arith.index_cast %2 : i32 to index
    %c0_0 = arith.constant 0 : index
    %c0_1 = arith.constant 0 : index
    %c0_2 = arith.constant 0 : index
    %4 = vector.load %arg2[%c0, %3, %c0_0, %c0_1, %c0_2] : memref<1x9x2x17x8xbf16, #tpu.memory_space<vmem>>, vector<1x8x1x17x8xbf16>
    %5 = vector.shape_cast %4 : vector<1x8x1x17x8xbf16> to vector<8x17x8xbf16>
    %6 = vector.extract_strided_slice %5 {offsets = [0, 0, 0], sizes = [8, 16, 8], strides = [1, 1, 1]} : vector<8x17x8xbf16> to vector<8x16x8xbf16>
    %7 = vector.shape_cast %6 : vector<8x16x8xbf16> to vector<128x8xbf16>
    %c0_3 = arith.constant 0 : index
    %c0_4 = arith.constant 0 : index
    %c0_5 = arith.constant 0 : index
    %8 = vector.load %arg3[%c0_3, %c0_4, %c0_5] : memref<6x8x8xbf16, #tpu.memory_space<vmem>>, vector<1x8x8xbf16>
    %9 = vector.shape_cast %8 : vector<1x8x8xbf16> to vector<8x8xbf16>
    %cst_6 = arith.constant dense<0.000000e+00> : vector<128x8xf32>
    %10 = tpu.matmul %7, %9, %cst_6 {dimension_numbers = #tpu.dot_dimension_numbers<[1], [0], [0], [1], [0, 0, 1, 1], [], []>} : vector<128x8xbf16>, vector<8x8xbf16>, vector<128x8xf32> -> vector<128x8xf32>
    %11 = arith.addf %1, %10 : vector<128x8xf32>
    %12 = vector.extract_strided_slice %5 {offsets = [0, 1, 0], sizes = [8, 16, 8], strides = [1, 1, 1]} : vector<8x17x8xbf16> to vector<8x16x8xbf16>
    %13 = vector.shape_cast %12 : vector<8x16x8xbf16> to vector<128x8xbf16>
    %c1 = arith.constant 1 : index
    %c0_7 = arith.constant 0 : index
    %c0_8 = arith.constant 0 : index
    %14 = vector.load %arg3[%c1, %c0_7, %c0_8] : memref<6x8x8xbf16, #tpu.memory_space<vmem>>, vector<1x8x8xbf16>
    %15 = vector.shape_cast %14 : vector<1x8x8xbf16> to vector<8x8xbf16>
    %cst_9 = arith.constant dense<0.000000e+00> : vector<128x8xf32>
    %16 = tpu.matmul %13, %15, %cst_9 {dimension_numbers = #tpu.dot_dimension_numbers<[1], [0], [0], [1], [0, 0, 1, 1], [], []>} : vector<128x8xbf16>, vector<8x8xbf16>, vector<128x8xf32> -> vector<128x8xf32>
    %17 = arith.addf %11, %16 : vector<128x8xf32>
    %c0_i32_10 = arith.constant 0 : i32
    %18 = arith.addi %0, %c0_i32_10 : i32
    %c0_11 = arith.constant 0 : index
    %19 = arith.index_cast %18 : i32 to index
    %c1_12 = arith.constant 1 : index
    %c0_13 = arith.constant 0 : index
    %c0_14 = arith.constant 0 : index
    %20 = vector.load %arg2[%c0_11, %19, %c1_12, %c0_13, %c0_14] : memref<1x9x2x17x8xbf16, #tpu.memory_space<vmem>>, vector<1x8x1x17x8xbf16>
    %21 = vector.shape_cast %20 : vector<1x8x1x17x8xbf16> to vector<8x17x8xbf16>
    %22 = vector.extract_strided_slice %21 {offsets = [0, 0, 0], sizes = [8, 16, 8], strides = [1, 1, 1]} : vector<8x17x8xbf16> to vector<8x16x8xbf16>
    %23 = vector.shape_cast %22 : vector<8x16x8xbf16> to vector<128x8xbf16>
    %c2 = arith.constant 2 : index
    %c0_15 = arith.constant 0 : index
    %c0_16 = arith.constant 0 : index
    %24 = vector.load %arg3[%c2, %c0_15, %c0_16] : memref<6x8x8xbf16, #tpu.memory_space<vmem>>, vector<1x8x8xbf16>
    %25 = vector.shape_cast %24 : vector<1x8x8xbf16> to vector<8x8xbf16>
    %cst_17 = arith.constant dense<0.000000e+00> : vector<128x8xf32>
    %26 = tpu.matmul %23, %25, %cst_17 {dimension_numbers = #tpu.dot_dimension_numbers<[1], [0], [0], [1], [0, 0, 1, 1], [], []>} : vector<128x8xbf16>, vector<8x8xbf16>, vector<128x8xf32> -> vector<128x8xf32>
    %27 = arith.addf %17, %26 : vector<128x8xf32>
    %28 = vector.extract_strided_slice %21 {offsets = [0, 1, 0], sizes = [8, 16, 8], strides = [1, 1, 1]} : vector<8x17x8xbf16> to vector<8x16x8xbf16>
    %29 = vector.shape_cast %28 : vector<8x16x8xbf16> to vector<128x8xbf16>
    %c3 = arith.constant 3 : index
    %c0_18 = arith.constant 0 : index
    %c0_19 = arith.constant 0 : index
    %30 = vector.load %arg3[%c3, %c0_18, %c0_19] : memref<6x8x8xbf16, #tpu.memory_space<vmem>>, vector<1x8x8xbf16>
    %31 = vector.shape_cast %30 : vector<1x8x8xbf16> to vector<8x8xbf16>
    %cst_20 = arith.constant dense<0.000000e+00> : vector<128x8xf32>
    %32 = tpu.matmul %29, %31, %cst_20 {dimension_numbers = #tpu.dot_dimension_numbers<[1], [0], [0], [1], [0, 0, 1, 1], [], []>} : vector<128x8xbf16>, vector<8x8xbf16>, vector<128x8xf32> -> vector<128x8xf32>
    %33 = arith.addf %27, %32 : vector<128x8xf32>
    %c1_i32 = arith.constant 1 : i32
    %34 = arith.addi %0, %c1_i32 : i32
    %c0_21 = arith.constant 0 : index
    %35 = arith.index_cast %34 : i32 to index
    %c0_22 = arith.constant 0 : index
    %c0_23 = arith.constant 0 : index
    %c0_24 = arith.constant 0 : index
    %36 = vector.load %arg2[%c0_21, %35, %c0_22, %c0_23, %c0_24] : memref<1x9x2x17x8xbf16, #tpu.memory_space<vmem>>, vector<1x8x1x17x8xbf16>
    %37 = vector.shape_cast %36 : vector<1x8x1x17x8xbf16> to vector<8x17x8xbf16>
    %38 = vector.extract_strided_slice %37 {offsets = [0, 0, 0], sizes = [8, 16, 8], strides = [1, 1, 1]} : vector<8x17x8xbf16> to vector<8x16x8xbf16>
    %39 = vector.shape_cast %38 : vector<8x16x8xbf16> to vector<128x8xbf16>
    %c4 = arith.constant 4 : index
    %c0_25 = arith.constant 0 : index
    %c0_26 = arith.constant 0 : index
    %40 = vector.load %arg3[%c4, %c0_25, %c0_26] : memref<6x8x8xbf16, #tpu.memory_space<vmem>>, vector<1x8x8xbf16>
    %41 = vector.shape_cast %40 : vector<1x8x8xbf16> to vector<8x8xbf16>
    %cst_27 = arith.constant dense<0.000000e+00> : vector<128x8xf32>
    %42 = tpu.matmul %39, %41, %cst_27 {dimension_numbers = #tpu.dot_dimension_numbers<[1], [0], [0], [1], [0, 0, 1, 1], [], []>} : vector<128x8xbf16>, vector<8x8xbf16>, vector<128x8xf32> -> vector<128x8xf32>
    %43 = arith.addf %33, %42 : vector<128x8xf32>
    %44 = vector.extract_strided_slice %37 {offsets = [0, 1, 0], sizes = [8, 16, 8], strides = [1, 1, 1]} : vector<8x17x8xbf16> to vector<8x16x8xbf16>
    %45 = vector.shape_cast %44 : vector<8x16x8xbf16> to vector<128x8xbf16>
    %c5 = arith.constant 5 : index
    %c0_28 = arith.constant 0 : index
    %c0_29 = arith.constant 0 : index
    %46 = vector.load %arg3[%c5, %c0_28, %c0_29] : memref<6x8x8xbf16, #tpu.memory_space<vmem>>, vector<1x8x8xbf16>
    %47 = vector.shape_cast %46 : vector<1x8x8xbf16> to vector<8x8xbf16>
    %cst_30 = arith.constant dense<0.000000e+00> : vector<128x8xf32>
    %48 = tpu.matmul %45, %47, %cst_30 {dimension_numbers = #tpu.dot_dimension_numbers<[1], [0], [0], [1], [0, 0, 1, 1], [], []>} : vector<128x8xbf16>, vector<8x8xbf16>, vector<128x8xf32> -> vector<128x8xf32>
    %49 = arith.addf %43, %48 : vector<128x8xf32>
    %c0_31 = arith.constant 0 : index
    %c0_32 = arith.constant 0 : index
    %50 = vector.load %arg4[%c0_31, %c0_32] : memref<1x8xf32, #tpu.memory_space<vmem>>, vector<1x8xf32>
    %51 = vector.broadcast %50 : vector<1x8xf32> to vector<128x8xf32>
    %52 = arith.addf %49, %51 : vector<128x8xf32>
    %cst_33 = arith.constant 0.000000e+00 : f32
    %53 = vector.broadcast %cst_33 : f32 to vector<128x8xf32>
    %54 = arith.cmpf oge, %52, %53 : vector<128x8xf32>
    %cst_34 = arith.constant 2.000000e-01 : f32
    %55 = vector.broadcast %cst_34 : f32 to vector<128x8xf32>
    %56 = arith.mulf %55, %52 : vector<128x8xf32>
    %57 = arith.select %54, %52, %56 : vector<128x8xi1>, vector<128x8xf32>
    %c0_35 = arith.constant 0 : index
    %c0_36 = arith.constant 0 : index
    %c0_37 = arith.constant 0 : index
    %58 = vector.load %arg5[%c0_35, %c0_36, %c0_37] : memref<1x128x8xf32, #tpu.memory_space<vmem>>, vector<1x128x8xf32>
    %59 = vector.shape_cast %58 : vector<1x128x8xf32> to vector<128x8xf32>
    %60 = vector.shape_cast %57 : vector<128x8xf32> to vector<1x128x8xf32>
    tpu.vector_store %arg5[%c0_35, %c0_36, %c0_37], %60 {strides = array<i32>} : memref<1x128x8xf32, #tpu.memory_space<vmem>>, vector<1x128x8xf32>,
    return
  }
  func.func @transform_0(%arg0: i32, %arg1: i32) -> (i32, i32, i32, i32, i32) {
    %c0_i32 = arith.constant 0 : i32
    %c0_i32_0 = arith.constant 0 : i32
    %c0_i32_1 = arith.constant 0 : i32
    %c0_i32_2 = arith.constant 0 : i32
    %c0_i32_3 = arith.constant 0 : i32
    return %arg0, %c0_i32, %c0_i32_0, %c0_i32_1, %c0_i32_2 : i32, i32, i32, i32, i32
  }
  func.func @transform_1(%arg0: i32, %arg1: i32) -> (i32, i32, i32) {
    %c0_i32 = arith.constant 0 : i32
    %c0_i32_0 = arith.constant 0 : i32
    %c0_i32_1 = arith.constant 0 : i32
    %c0_i32_2 = arith.constant 0 : i32
    return %c0_i32, %c0_i32_0, %c0_i32_1 : i32, i32, i32
  }
  func.func @transform_2(%arg0: i32, %arg1: i32) -> (i32, i32) {
    %c0_i32 = arith.constant 0 : i32
    %c0_i32_0 = arith.constant 0 : i32
    %c0_i32_1 = arith.constant 0 : i32
    return %c0_i32, %c0_i32_0 : i32, i32
  }
  func.func @transform_3(%arg0: i32, %arg1: i32) -> (i32, i32, i32) {
    %c0_i32 = arith.constant 0 : i32
    %c0_i32_0 = arith.constant 0 : i32
    return %arg0, %arg1, %c0_i32 : i32, i32, i32
  }
}

</mosaic_0001>

<llo_original>
// kernel: tpu_custom_call.1
$region0: #{tpu_custom_call.1}
  #allocation0 [shape = 'u32[]', space=smem, size = 0x4, offset = 0x4, fixed_abs, tag = 'smem constant byte address 0x4 - core index']
  #allocation1 [shape = 'u32[72,128]{1,0:T(1,128)}', space=vmem, size = 0x9000, scoped, tag = 'internal scratch']
  %s0 = inlined_call_operand.vmem [shape: bf16[2,9,2,17,8], index: 0, kind: input, shape index: {}]
  %s1 = inlined_call_operand.vmem [shape: bf16[6,8,8], index: 1, kind: input, shape index: {}]
  %s2 = inlined_call_operand.vmem [shape: f32[1,8], index: 2, kind: input, shape index: {}]
  %s3 = inlined_call_operand.vmem [shape: f32[2,128,8], index: 3, kind: output, shape index: {}]
  %s4 = sld [smem:[#allocation0]]
  $region45: #{tpu_custom_call.1} parent=0
    _
  %s6 = ssub.s32 1, %s4
  %s7 = scalar_select 0, %s6, %s4
  loop: start=0, step=1, limit=4
  $region2: #{tpu_custom_call.1} parent=0 // loop_pre_header
    _
  $region3: #{tpu_custom_call.1} parent=0 // loop_header
    %s9 = sphi 0, %s13
    %p10 = scmp.ge.s32.totalorder %s9, 4
    %s16 = sphi 0, %s28
    %s17 = sphi 0, %s24
    %s18 = sphi 0, %s16
    %s19 = sphi 0, %s17
    %s20 = sphi 0, %s18
    %s21 = sphi 0, %s19
    %s31 = sphi 0, %s33
    %s34 = sphi 0, %s31
    %s35 = sphi 0, %s34
    %s51 = sphi 0, %s35
    %s55 = sphi 0, %s55
    %s57 = sphi 0, %s55
    %s58 = sphi 0, %s57
    %s72 = sphi 0, %s58
    %s76 = sphi 0, %s76
    %s78 = sphi 0, %s76
    %s79 = sphi 0, %s78
    %s93 = sphi 0, %s79
    %s101 = sphi 0, %s103
    %s104 = sphi 0, %s101
    %s105 = sphi 0, %s104
    %s121 = sphi 0, %s105
  $region4: #{tpu_custom_call.1} parent=0 // loop_header_branch
    %12 = sbr.rel (%p10) target = $region8
  $region5: #{tpu_custom_call.1} parent=0 // loop_body
    %s14 = ssub.s32 %s9, 1
    %s15 = ssub.s32 %s9, 2
    %s22 = sadd.s32 1, %s17
    %p23 = scmp.ge.s32.totalorder %s22, 1
    %s24 = scalar_select %p23, 0, %s22
    %s25 = sadd.s32 1, %s16
    %s26 = scalar_select %p23, %s25, %s16
    %p27 = scmp.ge.s32.totalorder %s26, 2
    %s28 = scalar_select %p27, 0, %s26
    %s29 = ssub.s32 %s16, %s28
    %p30 = scmp.eq.s32.totalorder %s29, 0
    %s32 = sadd.s32 %s31, 1
    %s33 = scalar_select %p30, %s31, %s32
    %p36 = pneg %p30
    %p37 = scmp.eq.s32.totalorder %s9, 1
    %p38 = por %p36, %p37
    %p39 = scmp.ne.s32.totalorder %s31, %s34
    %p40 = scmp.eq.s32.totalorder %s9, 0
    %p41 = por %p39, %p40
    %p42 = scmp.ne.s32.totalorder %s31, %s34
    %p43 = scmp.eq.s32.totalorder %s14, 1
    %p44 = por %p42, %p43
    %p45 = scmp.ne.s32.totalorder %s34, %s35
    %p46 = scmp.eq.s32.totalorder %s14, 0
    %p47 = por %p45, %p46
    %p48 = scmp.ne.s32.totalorder %s34, %s35
    %p49 = scmp.eq.s32.totalorder %s15, 1
    %p50 = por %p48, %p49
    %p52 = scmp.ne.s32.totalorder %s35, %s51
    %p53 = scmp.eq.s32.totalorder %s15, 0
    %p54 = por %p52, %p53
    %s56 = sadd.s32 %s55, 1
    %p59 = scmp.eq.s32.totalorder %s9, 1
    %p60 = scmp.ne.s32.totalorder %s55, %s57
    %p61 = scmp.eq.s32.totalorder %s9, 0
    %p62 = por %p60, %p61
    %p63 = scmp.ne.s32.totalorder %s55, %s57
    %p64 = scmp.eq.s32.totalorder %s14, 1
    %p65 = por %p63, %p64
    %p66 = scmp.ne.s32.totalorder %s57, %s58
    %p67 = scmp.eq.s32.totalorder %s14, 0
    %p68 = por %p66, %p67
    %p69 = scmp.ne.s32.totalorder %s57, %s58
    %p70 = scmp.eq.s32.totalorder %s15, 1
    %p71 = por %p69, %p70
    %p73 = scmp.ne.s32.totalorder %s58, %s72
    %p74 = scmp.eq.s32.totalorder %s15, 0
    %p75 = por %p73, %p74
    %s77 = sadd.s32 %s76, 1
    %p80 = scmp.eq.s32.totalorder %s9, 1
    %p81 = scmp.ne.s32.totalorder %s76, %s78
    %p82 = scmp.eq.s32.totalorder %s9, 0
    %p83 = por %p81, %p82
    %p84 = scmp.ne.s32.totalorder %s76, %s78
    %p85 = scmp.eq.s32.totalorder %s14, 1
    %p86 = por %p84, %p85
    %p87 = scmp.ne.s32.totalorder %s78, %s79
    %p88 = scmp.eq.s32.totalorder %s14, 0
    %p89 = por %p87, %p88
    %p90 = scmp.ne.s32.totalorder %s78, %s79
    %p91 = scmp.eq.s32.totalorder %s15, 1
    %p92 = por %p90, %p91
    %p94 = scmp.ne.s32.totalorder %s79, %s93
    %p95 = scmp.eq.s32.totalorder %s15, 0
    %p96 = por %p94, %p95
    %s97 = ssub.s32 %s16, %s28
    %s98 = ssub.s32 %s17, %s24
    %s99 = sor.u32 %s97, %s98
    %p100 = scmp.eq.s32.totalorder %s99, 0
    %s102 = sadd.s32 %s101, 1
    %s103 = scalar_select %p100, %s101, %s102
    %p106 = pneg %p100
    %p107 = scmp.eq.s32.totalorder %s9, 1
    %p108 = por %p106, %p107
    %p109 = scmp.ne.s32.totalorder %s101, %s104
    %p110 = scmp.eq.s32.totalorder %s9, 0
    %p111 = por %p109, %p110
    %p112 = scmp.ne.s32.totalorder %s101, %s104
    %p113 = scmp.eq.s32.totalorder %s14, 1
    %p114 = por %p112, %p113
    %p115 = scmp.ne.s32.totalorder %s104, %s105
    %p116 = scmp.eq.s32.totalorder %s14, 0
    %p117 = por %p115, %p116
    %p118 = scmp.ne.s32.totalorder %s104, %s105
    %p119 = scmp.eq.s32.totalorder %s15, 1
    %p120 = por %p118, %p119
    %p122 = scmp.ne.s32.totalorder %s105, %s121
    %p123 = scmp.eq.s32.totalorder %s15, 0
    %p124 = por %p122, %p123
    %p125 = scmp.le.s32.totalorder 1, %s9
    %p126 = scmp.lt.s32.totalorder %s9, 3
    %p127 = pnand %p125, %p126
    %p128 = pneg %p127
    // Predicated region
    $region9: #{tpu_custom_call.1} parent=5 // pred_check
      _
    $region10: #{tpu_custom_call.1} parent=5 // pred_check_branch
      %130 = sbr.rel (%p127) target = $region12
    $region11: #{tpu_custom_call.1} parent=5 // pred_region
      %s131 = ssub.s32 %s9, 1
      // Predicated region
      $region13: #{tpu_custom_call.1} parent=11 // pred_check
        %p132 = pneg %p68
      $region14: #{tpu_custom_call.1} parent=11 // pred_check_branch
        %134 = sbr.rel (%p132) target = $region16
      $region15: #{tpu_custom_call.1} parent=11 // pred_region
        _
      $region16: #{tpu_custom_call.1} parent=11 // pred_fallthru
        _
      // Predicated region
      $region17: #{tpu_custom_call.1} parent=11 // pred_check
        %p135 = pneg %p89
      $region18: #{tpu_custom_call.1} parent=11 // pred_check_branch
        %137 = sbr.rel (%p135) target = $region20
      $region19: #{tpu_custom_call.1} parent=11 // pred_region
        _
      $region20: #{tpu_custom_call.1} parent=11 // pred_fallthru
        _
    $region12: #{tpu_custom_call.1} parent=5 // pred_fallthru
      _
    %p138 = scmp.lt.s32.totalorder %s9, 2
    // Predicated region
    $region21: #{tpu_custom_call.1} parent=5 // pred_check
      %p139 = pneg %p138
    $region22: #{tpu_custom_call.1} parent=5 // pred_check_branch
      %141 = sbr.rel (%p139) target = $region24
    $region23: #{tpu_custom_call.1} parent=5 // pred_region
      // Predicated region
      $region25: #{tpu_custom_call.1} parent=23 // pred_check
        %p142 = pneg %p41
      $region26: #{tpu_custom_call.1} parent=23 // pred_check_branch
        %144 = sbr.rel (%p142) target = $region28
      $region27: #{tpu_custom_call.1} parent=23 // pred_region
        %p145 = scmp.lt.s32.totalorder %s16, 1
        %s146 = scalar_select %p145, %s16, 1
        %s147 = smul.addr %s146, 54
        %s148 = smul.addr %s147, 4
        %s149 = scalar_lea.vmem %s0, %s148
      $region28: #{tpu_custom_call.1} parent=23 // pred_fallthru
        _
    $region24: #{tpu_custom_call.1} parent=5 // pred_fallthru
      _
    %p150 = scmp.le.s32.totalorder 1, %s9
    %p151 = scmp.lt.s32.totalorder %s9, 3
    %p152 = pnand %p150, %p151
    %p153 = pneg %p152
    // Predicated region
    $region29: #{tpu_custom_call.1} parent=5 // pred_check
      _
    $region30: #{tpu_custom_call.1} parent=5 // pred_check_branch
      %155 = sbr.rel (%p152) target = $region32
    $region31: #{tpu_custom_call.1} parent=5 // pred_region
      %s156 = ssub.s32 %s9, 1
      %p157 = scmp.lt.s32.totalorder %s18, 1
      %s158 = scalar_select %p157, %s18, 1
      %s159 = smul.addr %s158, 54
      %s160 = smul.addr %s159, 4
      %s161 = scalar_lea.vmem %s0, %s160
      %p162 = pneg %p47
      %p163 = pneg %p44
      %p164 = pneg %p68
      %p165 = pneg %p65
      %p166 = pneg %p89
      %p167 = pneg %p86
      %p168 = pneg %p117
      %p169 = pneg %p114
      %s170 = smul.u32 16, %s19
      %p171 = scmp.lt.s32.totalorder %s18, 1
      %s172 = scalar_select %p171, %s18, 1
      %p173 = scmp.lt.s32.totalorder %s170, 15
      %s174 = scalar_select %p173, %s170, 15
      %s175 = smul.addr %s172, 16
      %s176 = sadd.s32 %s174, %s175
      %s177 = smul.addr %s176, 8
      %s178 = scalar_lea.vmem %s3, %s177
      %p179 = scmp.lt.s32.totalorder %s18, 1
      %s180 = scalar_select %p179, %s18, 1
      %s181 = smul.addr %s180, 54
      %s182 = smul.addr %s181, 4
      %s183 = scalar_lea.vmem %s0, %s182
      %s184 = smul.u32 16, %s19
      %p185 = scmp.lt.s32.totalorder %s18, 1
      %s186 = scalar_select %p185, %s18, 1
      %p187 = scmp.lt.s32.totalorder %s184, 15
      %s188 = scalar_select %p187, %s184, 15
      %s189 = smul.addr %s186, 16
      %s190 = sadd.s32 %s188, %s189
      %s191 = smul.addr %s190, 8
      %s192 = scalar_lea.vmem %s3, %s191
      %s193 = smul.u32 16, %s19
      %s195 = smul.u32 %s19, 8
      %s196 = smul.u32 %s195, 6
      %s197 = smul.addr %s196, 4
      %s198 = scalar_lea.vmem %s183, %s197
      %v199 = vld [vmem:[%s198] sm:$0xf]
      %v200 = vld [vmem:[%s198 + $0x4] sm:$0xf]
      %v201 = vld [vmem:[%s198 + $0x8] sm:$0x1]
      %v202 = vld [vmem:[%s198 + $0x18] sm:$0xf]
      %v203 = vld [vmem:[%s198 + $0x1c] sm:$0xf]
      %v204 = vld [vmem:[%s198 + $0x20] sm:$0x1]
      %v205 = vld [vmem:[%s198 + $0x30] sm:$0xf]
      %v206 = vld [vmem:[%s198 + $0x34] sm:$0xf]
      %v207 = vld [vmem:[%s198 + $0x38] sm:$0x1]
      %v208 = vld [vmem:[%s198 + $0x48] sm:$0xf]
      %v209 = vld [vmem:[%s198 + $0x4c] sm:$0xf]
      %v210 = vld [vmem:[%s198 + $0x50] sm:$0x1]
      %v211 = vld [vmem:[%s198 + $0x60] sm:$0xf]
      %v212 = vld [vmem:[%s198 + $0x64] sm:$0xf]
      %v213 = vld [vmem:[%s198 + $0x68] sm:$0x1]
      %v214 = vld [vmem:[%s198 + $0x78] sm:$0xf]
      %v215 = vld [vmem:[%s198 + $0x7c] sm:$0xf]
      %v216 = vld [vmem:[%s198 + $0x80] sm:$0x1]
      %v217 = vld [vmem:[%s198 + $0x90] sm:$0xf]
      %v218 = vld [vmem:[%s198 + $0x94] sm:$0xf]
      %v219 = vld [vmem:[%s198 + $0x98] sm:$0x1]
      %v220 = vld [vmem:[%s198 + $0xa8] sm:$0xf]
      %v221 = vld [vmem:[%s198 + $0xac] sm:$0xf]
      %v222 = vld [vmem:[%s198 + $0xb0] sm:$0x1]
      %v223 = vld [vmem:[%s1] sm:$0xf]
      %vm224 = vsmask.f32 3328
      %vm225 = vsmask.f32 7440
      %vm226 = vmor %vm224, %vm225
      %v228 = vshrl.u32 %v199, 16
      %v230 = vrot.slane %v228, 4
      %v231 = vshll.u32 %v199, 16
      %v233 = vrot.slane %v231, 5
      %v234 = vor.u32 %v230, %v233
      %v235 = vrot.slane %v234, 4
      %v237 = vshll.u32 %v200, 16
      %v239 = vrot.slane %v237, 5
      %v240 = vsel %vm226, %v235, %v239
      %v241 = vshrl.u32 %v200, 16
      %v243 = vrot.slane %v241, 4
      %v244 = vor.u32 %v243, %v239
      %v245 = vrot.slane %v244, 4
      %v247 = vshll.u32 %v201, 16
      %v249 = vrot.slane %v247, 5
      %v250 = vsel %vm226, %v245, %v249
      %v252 = vshrl.u32 %v202, 16
      %v254 = vrot.slane %v252, 4
      %v255 = vshll.u32 %v202, 16
      %v257 = vrot.slane %v255, 5
      %v258 = vor.u32 %v254, %v257
      %v259 = vrot.slane %v258, 4
      %v261 = vshll.u32 %v203, 16
      %v263 = vrot.slane %v261, 5
      %v264 = vsel %vm226, %v259, %v263
      %v265 = vshrl.u32 %v203, 16
      %v267 = vrot.slane %v265, 4
      %v268 = vor.u32 %v267, %v263
      %v269 = vrot.slane %v268, 4
      %v271 = vshll.u32 %v204, 16
      %v273 = vrot.slane %v271, 5
      %v274 = vsel %vm226, %v269, %v273
      %v276 = vshrl.u32 %v205, 16
      %v278 = vrot.slane %v276, 4
      %v279 = vshll.u32 %v205, 16
      %v281 = vrot.slane %v279, 5
      %v282 = vor.u32 %v278, %v281
      %v283 = vrot.slane %v282, 4
      %v285 = vshll.u32 %v206, 16
      %v287 = vrot.slane %v285, 5
      %v288 = vsel %vm226, %v283, %v287
      %v289 = vshrl.u32 %v206, 16
      %v291 = vrot.slane %v289, 4
      %v292 = vor.u32 %v291, %v287
      %v293 = vrot.slane %v292, 4
      %v295 = vshll.u32 %v207, 16
      %v297 = vrot.slane %v295, 5
      %v298 = vsel %vm226, %v293, %v297
      %v300 = vshrl.u32 %v208, 16
      %v302 = vrot.slane %v300, 4
      %v303 = vshll.u32 %v208, 16
      %v305 = vrot.slane %v303, 5
      %v306 = vor.u32 %v302, %v305
      %v307 = vrot.slane %v306, 4
      %v309 = vshll.u32 %v209, 16
      %v311 = vrot.slane %v309, 5
      %v312 = vsel %vm226, %v307, %v311
      %v313 = vshrl.u32 %v209, 16
      %v315 = vrot.slane %v313, 4
      %v316 = vor.u32 %v315, %v311
      %v317 = vrot.slane %v316, 4
      %v319 = vshll.u32 %v210, 16
      %v321 = vrot.slane %v319, 5
      %v322 = vsel %vm226, %v317, %v321
      %v324 = vshrl.u32 %v211, 16
      %v326 = vrot.slane %v324, 4
      %v327 = vshll.u32 %v211, 16
      %v329 = vrot.slane %v327, 5
      %v330 = vor.u32 %v326, %v329
      %v331 = vrot.slane %v330, 4
      %v333 = vshll.u32 %v212, 16
      %v335 = vrot.slane %v333, 5
      %v336 = vsel %vm226, %v331, %v335
      %v337 = vshrl.u32 %v212, 16
      %v339 = vrot.slane %v337, 4
      %v340 = vor.u32 %v339, %v335
      %v341 = vrot.slane %v340, 4
      %v343 = vshll.u32 %v213, 16
      %v345 = vrot.slane %v343, 5
      %v346 = vsel %vm226, %v341, %v345
      %v348 = vshrl.u32 %v214, 16
      %v350 = vrot.slane %v348, 4
      %v351 = vshll.u32 %v214, 16
      %v353 = vrot.slane %v351, 5
      %v354 = vor.u32 %v350, %v353
      %v355 = vrot.slane %v354, 4
      %v357 = vshll.u32 %v215, 16
      %v359 = vrot.slane %v357, 5
      %v360 = vsel %vm226, %v355, %v359
      %v361 = vshrl.u32 %v215, 16
      %v363 = vrot.slane %v361, 4
      %v364 = vor.u32 %v363, %v359
      %v365 = vrot.slane %v364, 4
      %v367 = vshll.u32 %v216, 16
      %v369 = vrot.slane %v367, 5
      %v370 = vsel %vm226, %v365, %v369
      %v372 = vshrl.u32 %v217, 16
      %v374 = vrot.slane %v372, 4
      %v375 = vshll.u32 %v217, 16
      %v377 = vrot.slane %v375, 5
      %v378 = vor.u32 %v374, %v377
      %v379 = vrot.slane %v378, 4
      %v381 = vshll.u32 %v218, 16
      %v383 = vrot.slane %v381, 5
      %v384 = vsel %vm226, %v379, %v383
      %v385 = vshrl.u32 %v218, 16
      %v387 = vrot.slane %v385, 4
      %v388 = vor.u32 %v387, %v383
      %v389 = vrot.slane %v388, 4
      %v391 = vshll.u32 %v219, 16
      %v393 = vrot.slane %v391, 5
      %v394 = vsel %vm226, %v389, %v393
      %v396 = vshrl.u32 %v220, 16
      %v398 = vrot.slane %v396, 4
      %v399 = vshll.u32 %v220, 16
      %v401 = vrot.slane %v399, 5
      %v402 = vor.u32 %v398, %v401
      %v403 = vrot.slane %v402, 4
      %v405 = vshll.u32 %v221, 16
      %v407 = vrot.slane %v405, 5
      %v408 = vsel %vm226, %v403, %v407
      %v409 = vshrl.u32 %v221, 16
      %v411 = vrot.slane %v409, 4
      %v412 = vor.u32 %v411, %v407
      %v413 = vrot.slane %v412, 4
      %v415 = vshll.u32 %v222, 16
      %v417 = vrot.slane %v415, 5
      %v418 = vsel %vm226, %v413, %v417
      %s419 = scalar_lea.vmem %s1, 4
      %v420 = vld [vmem:[%s419] sm:$0xf]
      %v421 = vunpack.c.l.b16 %v240
      %v422 = vunpack.c.l.b16 %v250
      %v423 = vunpack.c.l.b16 %v264
      %v424 = vunpack.c.l.b16 %v274
      %v425 = vunpack.c.l.b16 %v288
      %v426 = vunpack.c.l.b16 %v298
      %v427 = vunpack.c.l.b16 %v312
      %v428 = vunpack.c.l.b16 %v322
      %v429 = vunpack.c.l.b16 %v336
      %v430 = vunpack.c.l.b16 %v346
      %v431 = vunpack.c.l.b16 %v360
      %v432 = vunpack.c.l.b16 %v370
      %v433 = vunpack.c.l.b16 %v384
      %v434 = vunpack.c.l.b16 %v394
      %v435 = vunpack.c.l.b16 %v408
      %v436 = vunpack.c.l.b16 %v418
      %v437 = vpack.c.b16 %v422, %v421
      %v438 = vpack.c.b16 %v424, %v423
      %v439 = vpack.c.b16 %v426, %v425
      %v440 = vpack.c.b16 %v428, %v427
      %v441 = vpack.c.b16 %v430, %v429
      %v442 = vpack.c.b16 %v432, %v431
      %v443 = vpack.c.b16 %v434, %v433
      %v444 = vpack.c.b16 %v436, %v435
      %vm445 = vcmask 64512
      %v447 = vsel %vm445, %v437, 0
      %v450 = vsel %vm445, %v438, 0
      %v453 = vsel %vm445, %v439, 0
      %v456 = vsel %vm445, %v440, 0
      %v459 = vsel %vm445, %v441, 0
      %v462 = vsel %vm445, %v442, 0
      %v465 = vsel %vm445, %v443, 0
      %v468 = vsel %vm445, %v444, 0
      %vm470 = vcmask 1043456
      %v472 = vsel %vm470, %v420, 0
      %474 = vmatpush.bf16.msra.mxu0 0
      %475 = vmatpush.bf16.msra.mxu0 0
      %476 = vmatpush.bf16.msra.mxu0 0
      %477 = vmatpush.bf16.msra.mxu0 0
      %478 = vmatpush.bf16.msra.mxu0 0
      %479 = vmatpush.bf16.msra.mxu0 0
      %480 = vmatpush.bf16.msra.mxu0 0
      %481 = vmatpush.bf16.msra.mxu0 %v472
      %482 = vmatmul.bf16.gmra.mxu0 %v447
      %v483 = vpop.f32.mrf.mxu0
      %v484 = vadd.f32 0.0, %v483
      %v485 = vpop.f32.mrf.mxu0
      %v486 = vadd.f32 0.0, %v485
      %487 = vmatmul.bf16.gmra.mxu0 %v450
      %v488 = vpop.f32.mrf.mxu0
      %v489 = vadd.f32 0.0, %v488
      %v490 = vpop.f32.mrf.mxu0
      %v491 = vadd.f32 0.0, %v490
      %492 = vmatmul.bf16.gmra.mxu0 %v453
      %v493 = vpop.f32.mrf.mxu0
      %v494 = vadd.f32 0.0, %v493
      %v495 = vpop.f32.mrf.mxu0
      %v496 = vadd.f32 0.0, %v495
      %497 = vmatmul.bf16.gmra.mxu0 %v456
      %v498 = vpop.f32.mrf.mxu0
      %v499 = vadd.f32 0.0, %v498
      %v500 = vpop.f32.mrf.mxu0
      %v501 = vadd.f32 0.0, %v500
      %502 = vmatmul.bf16.gmra.mxu0 %v459
      %v503 = vpop.f32.mrf.mxu0
      %v504 = vadd.f32 0.0, %v503
      %v505 = vpop.f32.mrf.mxu0
      %v506 = vadd.f32 0.0, %v505
      %507 = vmatmul.bf16.gmra.mxu0 %v462
      %v508 = vpop.f32.mrf.mxu0
      %v509 = vadd.f32 0.0, %v508
      %v510 = vpop.f32.mrf.mxu0
      %v511 = vadd.f32 0.0, %v510
      %512 = vmatmul.bf16.gmra.mxu0 %v465
      %v513 = vpop.f32.mrf.mxu0
      %v514 = vadd.f32 0.0, %v513
      %v515 = vpop.f32.mrf.mxu0
      %v516 = vadd.f32 0.0, %v515
      %517 = vmatmul.bf16.gmra.mxu0 %v468
      %v518 = vpop.f32.mrf.mxu0
      %v519 = vadd.f32 0.0, %v518
      %v520 = vpop.f32.mrf.mxu0
      %v521 = vadd.f32 0.0, %v520
      %522 = vdwg.mxu0
      %v539 = vunpack.c.l.b16 %v199
      %v540 = vunpack.c.l.b16 %v200
      %v541 = vunpack.c.l.b16 %v202
      %v542 = vunpack.c.l.b16 %v203
      %v543 = vunpack.c.l.b16 %v205
      %v544 = vunpack.c.l.b16 %v206
      %v545 = vunpack.c.l.b16 %v208
      %v546 = vunpack.c.l.b16 %v209
      %v547 = vunpack.c.l.b16 %v211
      %v548 = vunpack.c.l.b16 %v212
      %v549 = vunpack.c.l.b16 %v214
      %v550 = vunpack.c.l.b16 %v215
      %v551 = vunpack.c.l.b16 %v217
      %v552 = vunpack.c.l.b16 %v218
      %v553 = vunpack.c.l.b16 %v220
      %v554 = vunpack.c.l.b16 %v221
      %v555 = vpack.c.b16 %v540, %v539
      %v556 = vpack.c.b16 %v542, %v541
      %v557 = vpack.c.b16 %v544, %v543
      %v558 = vpack.c.b16 %v546, %v545
      %v559 = vpack.c.b16 %v548, %v547
      %v560 = vpack.c.b16 %v550, %v549
      %v561 = vpack.c.b16 %v552, %v551
      %v562 = vpack.c.b16 %v554, %v553
      %v564 = vsel %vm445, %v555, 0
      %v567 = vsel %vm445, %v556, 0
      %v570 = vsel %vm445, %v557, 0
      %v573 = vsel %vm445, %v558, 0
      %v576 = vsel %vm445, %v559, 0
      %v579 = vsel %vm445, %v560, 0
      %v582 = vsel %vm445, %v561, 0
      %v585 = vsel %vm445, %v562, 0
      %v588 = vsel %vm470, %v223, 0
      %590 = vmatpush.bf16.msra.mxu0 0
      %591 = vmatpush.bf16.msra.mxu0 0
      %592 = vmatpush.bf16.msra.mxu0 0
      %593 = vmatpush.bf16.msra.mxu0 0
      %594 = vmatpush.bf16.msra.mxu0 0
      %595 = vmatpush.bf16.msra.mxu0 0
      %596 = vmatpush.bf16.msra.mxu0 0
      %597 = vmatpush.bf16.msra.mxu0 %v588
      %598 = vmatmul.bf16.gmra.mxu0 %v564
      %v599 = vpop.f32.mrf.mxu0
      %v600 = vadd.f32 %v484, %v599
      %v601 = vpop.f32.mrf.mxu0
      %v602 = vadd.f32 %v486, %v601
      %603 = vmatmul.bf16.gmra.mxu0 %v567
      %v604 = vpop.f32.mrf.mxu0
      %v605 = vadd.f32 %v489, %v604
      %v606 = vpop.f32.mrf.mxu0
      %v607 = vadd.f32 %v491, %v606
      %608 = vmatmul.bf16.gmra.mxu0 %v570
      %v609 = vpop.f32.mrf.mxu0
      %v610 = vadd.f32 %v494, %v609
      %v611 = vpop.f32.mrf.mxu0
      %v612 = vadd.f32 %v496, %v611
      %613 = vmatmul.bf16.gmra.mxu0 %v573
      %v614 = vpop.f32.mrf.mxu0
      %v615 = vadd.f32 %v499, %v614
      %v616 = vpop.f32.mrf.mxu0
      %v617 = vadd.f32 %v501, %v616
      %618 = vmatmul.bf16.gmra.mxu0 %v576
      %v619 = vpop.f32.mrf.mxu0
      %v620 = vadd.f32 %v504, %v619
      %v621 = vpop.f32.mrf.mxu0
      %v622 = vadd.f32 %v506, %v621
      %623 = vmatmul.bf16.gmra.mxu0 %v579
      %v624 = vpop.f32.mrf.mxu0
      %v625 = vadd.f32 %v509, %v624
      %v626 = vpop.f32.mrf.mxu0
      %v627 = vadd.f32 %v511, %v626
      %628 = vmatmul.bf16.gmra.mxu0 %v582
      %v629 = vpop.f32.mrf.mxu0
      %v630 = vadd.f32 %v514, %v629
      %v631 = vpop.f32.mrf.mxu0
      %v632 = vadd.f32 %v516, %v631
      %633 = vmatmul.bf16.gmra.mxu0 %v585
      %v634 = vpop.f32.mrf.mxu0
      %v635 = vadd.f32 %v519, %v634
      %v636 = vpop.f32.mrf.mxu0
      %v637 = vadd.f32 %v521, %v636
      %638 = vdwg.mxu0
      %s639 = sadd.s32 3, %s196
      %s640 = smul.addr %s639, 4
      %s641 = scalar_lea.vmem %s183, %s640
      %v642 = vld [vmem:[%s641] sm:$0xf]
      %v643 = vld [vmem:[%s641 + $0x4] sm:$0xf]
      %v644 = vld [vmem:[%s641 + $0x8] sm:$0x1]
      %v645 = vld [vmem:[%s641 + $0x18] sm:$0xf]
      %v646 = vld [vmem:[%s641 + $0x1c] sm:$0xf]
      %v647 = vld [vmem:[%s641 + $0x20] sm:$0x1]
      %v648 = vld [vmem:[%s641 + $0x30] sm:$0xf]
      %v649 = vld [vmem:[%s641 + $0x34] sm:$0xf]
      %v650 = vld [vmem:[%s641 + $0x38] sm:$0x1]
      %v651 = vld [vmem:[%s641 + $0x48] sm:$0xf]
      %v652 = vld [vmem:[%s641 + $0x4c] sm:$0xf]
      %v653 = vld [vmem:[%s641 + $0x50] sm:$0x1]
      %v654 = vld [vmem:[%s641 + $0x60] sm:$0xf]
      %v655 = vld [vmem:[%s641 + $0x64] sm:$0xf]
      %v656 = vld [vmem:[%s641 + $0x68] sm:$0x1]
      %v657 = vld [vmem:[%s641 + $0x78] sm:$0xf]
      %v658 = vld [vmem:[%s641 + $0x7c] sm:$0xf]
      %v659 = vld [vmem:[%s641 + $0x80] sm:$0x1]
      %v660 = vld [vmem:[%s641 + $0x90] sm:$0xf]
      %v661 = vld [vmem:[%s641 + $0x94] sm:$0xf]
      %v662 = vld [vmem:[%s641 + $0x98] sm:$0x1]
      %v663 = vld [vmem:[%s641 + $0xa8] sm:$0xf]
      %v664 = vld [vmem:[%s641 + $0xac] sm:$0xf]
      %v665 = vld [vmem:[%s641 + $0xb0] sm:$0x1]
      %s666 = scalar_lea.vmem %s1, 8
      %v667 = vld [vmem:[%s666] sm:$0xf]
      %v684 = vunpack.c.l.b16 %v642
      %v685 = vunpack.c.l.b16 %v643
      %v686 = vunpack.c.l.b16 %v645
      %v687 = vunpack.c.l.b16 %v646
      %v688 = vunpack.c.l.b16 %v648
      %v689 = vunpack.c.l.b16 %v649
      %v690 = vunpack.c.l.b16 %v651
      %v691 = vunpack.c.l.b16 %v652
      %v692 = vunpack.c.l.b16 %v654
      %v693 = vunpack.c.l.b16 %v655
      %v694 = vunpack.c.l.b16 %v657
      %v695 = vunpack.c.l.b16 %v658
      %v696 = vunpack.c.l.b16 %v660
      %v697 = vunpack.c.l.b16 %v661
      %v698 = vunpack.c.l.b16 %v663
      %v699 = vunpack.c.l.b16 %v664
      %v700 = vpack.c.b16 %v685, %v684
      %v701 = vpack.c.b16 %v687, %v686
      %v702 = vpack.c.b16 %v689, %v688
      %v703 = vpack.c.b16 %v691, %v690
      %v704 = vpack.c.b16 %v693, %v692
      %v705 = vpack.c.b16 %v695, %v694
      %v706 = vpack.c.b16 %v697, %v696
      %v707 = vpack.c.b16 %v699, %v698
      %v709 = vsel %vm445, %v700, 0
      %v712 = vsel %vm445, %v701, 0
      %v715 = vsel %vm445, %v702, 0
      %v718 = vsel %vm445, %v703, 0
      %v721 = vsel %vm445, %v704, 0
      %v724 = vsel %vm445, %v705, 0
      %v727 = vsel %vm445, %v706, 0
      %v730 = vsel %vm445, %v707, 0
      %v733 = vsel %vm470, %v667, 0
      %735 = vmatpush.bf16.msra.mxu0 0
      %736 = vmatpush.bf16.msra.mxu0 0
      %737 = vmatpush.bf16.msra.mxu0 0
      %738 = vmatpush.bf16.msra.mxu0 0
      %739 = vmatpush.bf16.msra.mxu0 0
      %740 = vmatpush.bf16.msra.mxu0 0
      %741 = vmatpush.bf16.msra.mxu0 0
      %742 = vmatpush.bf16.msra.mxu0 %v733
      %743 = vmatmul.bf16.gmra.mxu0 %v709
      %v744 = vpop.f32.mrf.mxu0
      %v745 = vadd.f32 0.0, %v744
      %v746 = vpop.f32.mrf.mxu0
      %v747 = vadd.f32 0.0, %v746
      %748 = vmatmul.bf16.gmra.mxu0 %v712
      %v749 = vpop.f32.mrf.mxu0
      %v750 = vadd.f32 0.0, %v749
      %v751 = vpop.f32.mrf.mxu0
      %v752 = vadd.f32 0.0, %v751
      %753 = vmatmul.bf16.gmra.mxu0 %v715
      %v754 = vpop.f32.mrf.mxu0
      %v755 = vadd.f32 0.0, %v754
      %v756 = vpop.f32.mrf.mxu0
      %v757 = vadd.f32 0.0, %v756
      %758 = vmatmul.bf16.gmra.mxu0 %v718
      %v759 = vpop.f32.mrf.mxu0
      %v760 = vadd.f32 0.0, %v759
      %v761 = vpop.f32.mrf.mxu0
      %v762 = vadd.f32 0.0, %v761
      %763 = vmatmul.bf16.gmra.mxu0 %v721
      %v764 = vpop.f32.mrf.mxu0
      %v765 = vadd.f32 0.0, %v764
      %v766 = vpop.f32.mrf.mxu0
      %v767 = vadd.f32 0.0, %v766
      %768 = vmatmul.bf16.gmra.mxu0 %v724
      %v769 = vpop.f32.mrf.mxu0
      %v770 = vadd.f32 0.0, %v769
      %v771 = vpop.f32.mrf.mxu0
      %v772 = vadd.f32 0.0, %v771
      %773 = vmatmul.bf16.gmra.mxu0 %v727
      %v774 = vpop.f32.mrf.mxu0
      %v775 = vadd.f32 0.0, %v774
      %v776 = vpop.f32.mrf.mxu0
      %v777 = vadd.f32 0.0, %v776
      %778 = vmatmul.bf16.gmra.mxu0 %v730
      %v779 = vpop.f32.mrf.mxu0
      %v780 = vadd.f32 0.0, %v779
      %v781 = vpop.f32.mrf.mxu0
      %v782 = vadd.f32 0.0, %v781
      %783 = vdwg.mxu0
      %v784 = vadd.f32 %v600, %v745
      %v785 = vadd.f32 %v602, %v747
      %v786 = vadd.f32 %v605, %v750
      %v787 = vadd.f32 %v607, %v752
      %v788 = vadd.f32 %v610, %v755
      %v789 = vadd.f32 %v612, %v757
      %v790 = vadd.f32 %v615, %v760
      %v791 = vadd.f32 %v617, %v762
      %v792 = vadd.f32 %v620, %v765
      %v793 = vadd.f32 %v622, %v767
      %v794 = vadd.f32 %v625, %v770
      %v795 = vadd.f32 %v627, %v772
      %v796 = vadd.f32 %v630, %v775
      %v797 = vadd.f32 %v632, %v777
      %v798 = vadd.f32 %v635, %v780
      %v799 = vadd.f32 %v637, %v782
      %v801 = vshrl.u32 %v642, 16
      %v803 = vrot.slane %v801, 4
      %v804 = vshll.u32 %v642, 16
      %v806 = vrot.slane %v804, 5
      %v807 = vor.u32 %v803, %v806
      %v808 = vrot.slane %v807, 4
      %v810 = vshll.u32 %v643, 16
      %v812 = vrot.slane %v810, 5
      %v813 = vsel %vm226, %v808, %v812
      %v814 = vshrl.u32 %v643, 16
      %v816 = vrot.slane %v814, 4
      %v817 = vor.u32 %v816, %v812
      %v818 = vrot.slane %v817, 4
      %v820 = vshll.u32 %v644, 16
      %v822 = vrot.slane %v820, 5
      %v823 = vsel %vm226, %v818, %v822
      %v825 = vshrl.u32 %v645, 16
      %v827 = vrot.slane %v825, 4
      %v828 = vshll.u32 %v645, 16
      %v830 = vrot.slane %v828, 5
      %v831 = vor.u32 %v827, %v830
      %v832 = vrot.slane %v831, 4
      %v834 = vshll.u32 %v646, 16
      %v836 = vrot.slane %v834, 5
      %v837 = vsel %vm226, %v832, %v836
      %v838 = vshrl.u32 %v646, 16
      %v840 = vrot.slane %v838, 4
      %v841 = vor.u32 %v840, %v836
      %v842 = vrot.slane %v841, 4
      %v844 = vshll.u32 %v647, 16
      %v846 = vrot.slane %v844, 5
      %v847 = vsel %vm226, %v842, %v846
      %v849 = vshrl.u32 %v648, 16
      %v851 = vrot.slane %v849, 4
      %v852 = vshll.u32 %v648, 16
      %v854 = vrot.slane %v852, 5
      %v855 = vor.u32 %v851, %v854
      %v856 = vrot.slane %v855, 4
      %v858 = vshll.u32 %v649, 16
      %v860 = vrot.slane %v858, 5
      %v861 = vsel %vm226, %v856, %v860
      %v862 = vshrl.u32 %v649, 16
      %v864 = vrot.slane %v862, 4
      %v865 = vor.u32 %v864, %v860
      %v866 = vrot.slane %v865, 4
      %v868 = vshll.u32 %v650, 16
      %v870 = vrot.slane %v868, 5
      %v871 = vsel %vm226, %v866, %v870
      %v873 = vshrl.u32 %v651, 16
      %v875 = vrot.slane %v873, 4
      %v876 = vshll.u32 %v651, 16
      %v878 = vrot.slane %v876, 5
      %v879 = vor.u32 %v875, %v878
      %v880 = vrot.slane %v879, 4
      %v882 = vshll.u32 %v652, 16
      %v884 = vrot.slane %v882, 5
      %v885 = vsel %vm226, %v880, %v884
      %v886 = vshrl.u32 %v652, 16
      %v888 = vrot.slane %v886, 4
      %v889 = vor.u32 %v888, %v884
      %v890 = vrot.slane %v889, 4
      %v892 = vshll.u32 %v653, 16
      %v894 = vrot.slane %v892, 5
      %v895 = vsel %vm226, %v890, %v894
      %v897 = vshrl.u32 %v654, 16
      %v899 = vrot.slane %v897, 4
      %v900 = vshll.u32 %v654, 16
      %v902 = vrot.slane %v900, 5
      %v903 = vor.u32 %v899, %v902
      %v904 = vrot.slane %v903, 4
      %v906 = vshll.u32 %v655, 16
      %v908 = vrot.slane %v906, 5
      %v909 = vsel %vm226, %v904, %v908
      %v910 = vshrl.u32 %v655, 16
      %v912 = vrot.slane %v910, 4
      %v913 = vor.u32 %v912, %v908
      %v914 = vrot.slane %v913, 4
      %v916 = vshll.u32 %v656, 16
      %v918 = vrot.slane %v916, 5
      %v919 = vsel %vm226, %v914, %v918
      %v921 = vshrl.u32 %v657, 16
      %v923 = vrot.slane %v921, 4
      %v924 = vshll.u32 %v657, 16
      %v926 = vrot.slane %v924, 5
      %v927 = vor.u32 %v923, %v926
      %v928 = vrot.slane %v927, 4
      %v930 = vshll.u32 %v658, 16
      %v932 = vrot.slane %v930, 5
      %v933 = vsel %vm226, %v928, %v932
      %v934 = vshrl.u32 %v658, 16
      %v936 = vrot.slane %v934, 4
      %v937 = vor.u32 %v936, %v932
      %v938 = vrot.slane %v937, 4
      %v940 = vshll.u32 %v659, 16
      %v942 = vrot.slane %v940, 5
      %v943 = vsel %vm226, %v938, %v942
      %v945 = vshrl.u32 %v660, 16
      %v947 = vrot.slane %v945, 4
      %v948 = vshll.u32 %v660, 16
      %v950 = vrot.slane %v948, 5
      %v951 = vor.u32 %v947, %v950
      %v952 = vrot.slane %v951, 4
      %v954 = vshll.u32 %v661, 16
      %v956 = vrot.slane %v954, 5
      %v957 = vsel %vm226, %v952, %v956
      %v958 = vshrl.u32 %v661, 16
      %v960 = vrot.slane %v958, 4
      %v961 = vor.u32 %v960, %v956
      %v962 = vrot.slane %v961, 4
      %v964 = vshll.u32 %v662, 16
      %v966 = vrot.slane %v964, 5
      %v967 = vsel %vm226, %v962, %v966
      %v969 = vshrl.u32 %v663, 16
      %v971 = vrot.slane %v969, 4
      %v972 = vshll.u32 %v663, 16
      %v974 = vrot.slane %v972, 5
      %v975 = vor.u32 %v971, %v974
      %v976 = vrot.slane %v975, 4
      %v978 = vshll.u32 %v664, 16
      %v980 = vrot.slane %v978, 5
      %v981 = vsel %vm226, %v976, %v980
      %v982 = vshrl.u32 %v664, 16
      %v984 = vrot.slane %v982, 4
      %v985 = vor.u32 %v984, %v980
      %v986 = vrot.slane %v985, 4
      %v988 = vshll.u32 %v665, 16
      %v990 = vrot.slane %v988, 5
      %v991 = vsel %vm226, %v986, %v990
      %s992 = scalar_lea.vmem %s1, 12
      %v993 = vld [vmem:[%s992] sm:$0xf]
      %v994 = vunpack.c.l.b16 %v813
      %v995 = vunpack.c.l.b16 %v823
      %v996 = vunpack.c.l.b16 %v837
      %v997 = vunpack.c.l.b16 %v847
      %v998 = vunpack.c.l.b16 %v861
      %v999 = vunpack.c.l.b16 %v871
      %v1000 = vunpack.c.l.b16 %v885
      %v1001 = vunpack.c.l.b16 %v895
      %v1002 = vunpack.c.l.b16 %v909
      %v1003 = vunpack.c.l.b16 %v919
      %v1004 = vunpack.c.l.b16 %v933
      %v1005 = vunpack.c.l.b16 %v943
      %v1006 = vunpack.c.l.b16 %v957
      %v1007 = vunpack.c.l.b16 %v967
      %v1008 = vunpack.c.l.b16 %v981
      %v1009 = vunpack.c.l.b16 %v991
      %v1010 = vpack.c.b16 %v995, %v994
      %v1011 = vpack.c.b16 %v997, %v996
      %v1012 = vpack.c.b16 %v999, %v998
      %v1013 = vpack.c.b16 %v1001, %v1000
      %v1014 = vpack.c.b16 %v1003, %v1002
      %v1015 = vpack.c.b16 %v1005, %v1004
      %v1016 = vpack.c.b16 %v1007, %v1006
      %v1017 = vpack.c.b16 %v1009, %v1008
      %v1019 = vsel %vm445, %v1010, 0
      %v1022 = vsel %vm445, %v1011, 0
      %v1025 = vsel %vm445, %v1012, 0
      %v1028 = vsel %vm445, %v1013, 0
      %v1031 = vsel %vm445, %v1014, 0
      %v1034 = vsel %vm445, %v1015, 0
      %v1037 = vsel %vm445, %v1016, 0
      %v1040 = vsel %vm445, %v1017, 0
      %v1043 = vsel %vm470, %v993, 0
      %1045 = vmatpush.bf16.msra.mxu0 0
      %1046 = vmatpush.bf16.msra.mxu0 0
      %1047 = vmatpush.bf16.msra.mxu0 0
      %1048 = vmatpush.bf16.msra.mxu0 0
      %1049 = vmatpush.bf16.msra.mxu0 0
      %1050 = vmatpush.bf16.msra.mxu0 0
      %1051 = vmatpush.bf16.msra.mxu0 0
      %1052 = vmatpush.bf16.msra.mxu0 %v1043
      %1053 = vmatmul.bf16.gmra.mxu0 %v1019
      %v1054 = vpop.f32.mrf.mxu0
      %v1055 = vadd.f32 0.0, %v1054
      %v1056 = vpop.f32.mrf.mxu0
      %v1057 = vadd.f32 0.0, %v1056
      %1058 = vmatmul.bf16.gmra.mxu0 %v1022
      %v1059 = vpop.f32.mrf.mxu0
      %v1060 = vadd.f32 0.0, %v1059
      %v1061 = vpop.f32.mrf.mxu0
      %v1062 = vadd.f32 0.0, %v1061
      %1063 = vmatmul.bf16.gmra.mxu0 %v1025
      %v1064 = vpop.f32.mrf.mxu0
      %v1065 = vadd.f32 0.0, %v1064
      %v1066 = vpop.f32.mrf.mxu0
      %v1067 = vadd.f32 0.0, %v1066
      %1068 = vmatmul.bf16.gmra.mxu0 %v1028
      %v1069 = vpop.f32.mrf.mxu0
      %v1070 = vadd.f32 0.0, %v1069
      %v1071 = vpop.f32.mrf.mxu0
      %v1072 = vadd.f32 0.0, %v1071
      %1073 = vmatmul.bf16.gmra.mxu0 %v1031
      %v1074 = vpop.f32.mrf.mxu0
      %v1075 = vadd.f32 0.0, %v1074
      %v1076 = vpop.f32.mrf.mxu0
      %v1077 = vadd.f32 0.0, %v1076
      %1078 = vmatmul.bf16.gmra.mxu0 %v1034
      %v1079 = vpop.f32.mrf.mxu0
      %v1080 = vadd.f32 0.0, %v1079
      %v1081 = vpop.f32.mrf.mxu0
      %v1082 = vadd.f32 0.0, %v1081
      %1083 = vmatmul.bf16.gmra.mxu0 %v1037
      %v1084 = vpop.f32.mrf.mxu0
      %v1085 = vadd.f32 0.0, %v1084
      %v1086 = vpop.f32.mrf.mxu0
      %v1087 = vadd.f32 0.0, %v1086
      %1088 = vmatmul.bf16.gmra.mxu0 %v1040
      %v1089 = vpop.f32.mrf.mxu0
      %v1090 = vadd.f32 0.0, %v1089
      %v1091 = vpop.f32.mrf.mxu0
      %v1092 = vadd.f32 0.0, %v1091
      %1093 = vdwg.mxu0
      %v1094 = vadd.f32 %v784, %v1055
      %v1095 = vadd.f32 %v785, %v1057
      %v1096 = vadd.f32 %v786, %v1060
      %v1097 = vadd.f32 %v787, %v1062
      %v1098 = vadd.f32 %v788, %v1065
      %v1099 = vadd.f32 %v789, %v1067
      %v1100 = vadd.f32 %v790, %v1070
      %v1101 = vadd.f32 %v791, %v1072
      %v1102 = vadd.f32 %v792, %v1075
      %v1103 = vadd.f32 %v793, %v1077
      %v1104 = vadd.f32 %v794, %v1080
      %v1105 = vadd.f32 %v795, %v1082
      %v1106 = vadd.f32 %v796, %v1085
      %v1107 = vadd.f32 %v797, %v1087
      %v1108 = vadd.f32 %v798, %v1090
      %v1109 = vadd.f32 %v799, %v1092
      %s1110 = sadd.s32 %s195, 1
      %s1111 = smul.u32 %s1110, 6
      %s1112 = smul.addr %s1111, 4
      %s1113 = scalar_lea.vmem %s183, %s1112
      %v1114 = vld [vmem:[%s1113] sm:$0xf]
      %v1115 = vld [vmem:[%s1113 + $0x4] sm:$0xf]
      %v1116 = vld [vmem:[%s1113 + $0x8] sm:$0x1]
      %v1117 = vld [vmem:[%s1113 + $0x18] sm:$0xf]
      %v1118 = vld [vmem:[%s1113 + $0x1c] sm:$0xf]
      %v1119 = vld [vmem:[%s1113 + $0x20] sm:$0x1]
      %v1120 = vld [vmem:[%s1113 + $0x30] sm:$0xf]
      %v1121 = vld [vmem:[%s1113 + $0x34] sm:$0xf]
      %v1122 = vld [vmem:[%s1113 + $0x38] sm:$0x1]
      %v1123 = vld [vmem:[%s1113 + $0x48] sm:$0xf]
      %v1124 = vld [vmem:[%s1113 + $0x4c] sm:$0xf]
      %v1125 = vld [vmem:[%s1113 + $0x50] sm:$0x1]
      %v1126 = vld [vmem:[%s1113 + $0x60] sm:$0xf]
      %v1127 = vld [vmem:[%s1113 + $0x64] sm:$0xf]
      %v1128 = vld [vmem:[%s1113 + $0x68] sm:$0x1]
      %v1129 = vld [vmem:[%s1113 + $0x78] sm:$0xf]
      %v1130 = vld [vmem:[%s1113 + $0x7c] sm:$0xf]
      %v1131 = vld [vmem:[%s1113 + $0x80] sm:$0x1]
      %v1132 = vld [vmem:[%s1113 + $0x90] sm:$0xf]
      %v1133 = vld [vmem:[%s1113 + $0x94] sm:$0xf]
      %v1134 = vld [vmem:[%s1113 + $0x98] sm:$0x1]
      %v1135 = vld [vmem:[%s1113 + $0xa8] sm:$0xf]
      %v1136 = vld [vmem:[%s1113 + $0xac] sm:$0xf]
      %v1137 = vld [vmem:[%s1113 + $0xb0] sm:$0x1]
      %s1138 = scalar_lea.vmem %s1, 16
      %v1139 = vld [vmem:[%s1138] sm:$0xf]
      %v1156 = vunpack.c.l.b16 %v1114
      %v1157 = vunpack.c.l.b16 %v1115
      %v1158 = vunpack.c.l.b16 %v1117
      %v1159 = vunpack.c.l.b16 %v1118
      %v1160 = vunpack.c.l.b16 %v1120
      %v1161 = vunpack.c.l.b16 %v1121
      %v1162 = vunpack.c.l.b16 %v1123
      %v1163 = vunpack.c.l.b16 %v1124
      %v1164 = vunpack.c.l.b16 %v1126
      %v1165 = vunpack.c.l.b16 %v1127
      %v1166 = vunpack.c.l.b16 %v1129
      %v1167 = vunpack.c.l.b16 %v1130
      %v1168 = vunpack.c.l.b16 %v1132
      %v1169 = vunpack.c.l.b16 %v1133
      %v1170 = vunpack.c.l.b16 %v1135
      %v1171 = vunpack.c.l.b16 %v1136
      %v1172 = vpack.c.b16 %v1157, %v1156
      %v1173 = vpack.c.b16 %v1159, %v1158
      %v1174 = vpack.c.b16 %v1161, %v1160
      %v1175 = vpack.c.b16 %v1163, %v1162
      %v1176 = vpack.c.b16 %v1165, %v1164
      %v1177 = vpack.c.b16 %v1167, %v1166
      %v1178 = vpack.c.b16 %v1169, %v1168
      %v1179 = vpack.c.b16 %v1171, %v1170
      %v1181 = vsel %vm445, %v1172, 0
      %v1184 = vsel %vm445, %v1173, 0
      %v1187 = vsel %vm445, %v1174, 0
      %v1190 = vsel %vm445, %v1175, 0
      %v1193 = vsel %vm445, %v1176, 0
      %v1196 = vsel %vm445, %v1177, 0
      %v1199 = vsel %vm445, %v1178, 0
      %v1202 = vsel %vm445, %v1179, 0
      %v1205 = vsel %vm470, %v1139, 0
      %1207 = vmatpush.bf16.msra.mxu0 0
      %1208 = vmatpush.bf16.msra.mxu0 0
      %1209 = vmatpush.bf16.msra.mxu0 0
      %1210 = vmatpush.bf16.msra.mxu0 0
      %1211 = vmatpush.bf16.msra.mxu0 0
      %1212 = vmatpush.bf16.msra.mxu0 0
      %1213 = vmatpush.bf16.msra.mxu0 0
      %1214 = vmatpush.bf16.msra.mxu0 %v1205
      %1215 = vmatmul.bf16.gmra.mxu0 %v1181
      %v1216 = vpop.f32.mrf.mxu0
      %v1217 = vadd.f32 0.0, %v1216
      %v1218 = vpop.f32.mrf.mxu0
      %v1219 = vadd.f32 0.0, %v1218
      %1220 = vmatmul.bf16.gmra.mxu0 %v1184
      %v1221 = vpop.f32.mrf.mxu0
      %v1222 = vadd.f32 0.0, %v1221
      %v1223 = vpop.f32.mrf.mxu0
      %v1224 = vadd.f32 0.0, %v1223
      %1225 = vmatmul.bf16.gmra.mxu0 %v1187
      %v1226 = vpop.f32.mrf.mxu0
      %v1227 = vadd.f32 0.0, %v1226
      %v1228 = vpop.f32.mrf.mxu0
      %v1229 = vadd.f32 0.0, %v1228
      %1230 = vmatmul.bf16.gmra.mxu0 %v1190
      %v1231 = vpop.f32.mrf.mxu0
      %v1232 = vadd.f32 0.0, %v1231
      %v1233 = vpop.f32.mrf.mxu0
      %v1234 = vadd.f32 0.0, %v1233
      %1235 = vmatmul.bf16.gmra.mxu0 %v1193
      %v1236 = vpop.f32.mrf.mxu0
      %v1237 = vadd.f32 0.0, %v1236
      %v1238 = vpop.f32.mrf.mxu0
      %v1239 = vadd.f32 0.0, %v1238
      %1240 = vmatmul.bf16.gmra.mxu0 %v1196
      %v1241 = vpop.f32.mrf.mxu0
      %v1242 = vadd.f32 0.0, %v1241
      %v1243 = vpop.f32.mrf.mxu0
      %v1244 = vadd.f32 0.0, %v1243
      %1245 = vmatmul.bf16.gmra.mxu0 %v1199
      %v1246 = vpop.f32.mrf.mxu0
      %v1247 = vadd.f32 0.0, %v1246
      %v1248 = vpop.f32.mrf.mxu0
      %v1249 = vadd.f32 0.0, %v1248
      %1250 = vmatmul.bf16.gmra.mxu0 %v1202
      %v1251 = vpop.f32.mrf.mxu0
      %v1252 = vadd.f32 0.0, %v1251
      %v1253 = vpop.f32.mrf.mxu0
      %v1254 = vadd.f32 0.0, %v1253
      %1255 = vdwg.mxu0
      %v1256 = vadd.f32 %v1094, %v1217
      %v1257 = vadd.f32 %v1095, %v1219
      %v1258 = vadd.f32 %v1096, %v1222
      %v1259 = vadd.f32 %v1097, %v1224
      %v1260 = vadd.f32 %v1098, %v1227
      %v1261 = vadd.f32 %v1099, %v1229
      %v1262 = vadd.f32 %v1100, %v1232
      %v1263 = vadd.f32 %v1101, %v1234
      %v1264 = vadd.f32 %v1102, %v1237
      %v1265 = vadd.f32 %v1103, %v1239
      %v1266 = vadd.f32 %v1104, %v1242
      %v1267 = vadd.f32 %v1105, %v1244
      %v1268 = vadd.f32 %v1106, %v1247
      %v1269 = vadd.f32 %v1107, %v1249
      %v1270 = vadd.f32 %v1108, %v1252
      %v1271 = vadd.f32 %v1109, %v1254
      %v1273 = vshrl.u32 %v1114, 16
      %v1275 = vrot.slane %v1273, 4
      %v1276 = vshll.u32 %v1114, 16
      %v1278 = vrot.slane %v1276, 5
      %v1279 = vor.u32 %v1275, %v1278
      %v1280 = vrot.slane %v1279, 4
      %v1282 = vshll.u32 %v1115, 16
      %v1284 = vrot.slane %v1282, 5
      %v1285 = vsel %vm226, %v1280, %v1284
      %v1286 = vshrl.u32 %v1115, 16
      %v1288 = vrot.slane %v1286, 4
      %v1289 = vor.u32 %v1288, %v1284
      %v1290 = vrot.slane %v1289, 4
      %v1292 = vshll.u32 %v1116, 16
      %v1294 = vrot.slane %v1292, 5
      %v1295 = vsel %vm226, %v1290, %v1294
      %v1297 = vshrl.u32 %v1117, 16
      %v1299 = vrot.slane %v1297, 4
      %v1300 = vshll.u32 %v1117, 16
      %v1302 = vrot.slane %v1300, 5
      %v1303 = vor.u32 %v1299, %v1302
      %v1304 = vrot.slane %v1303, 4
      %v1306 = vshll.u32 %v1118, 16
      %v1308 = vrot.slane %v1306, 5
      %v1309 = vsel %vm226, %v1304, %v1308
      %v1310 = vshrl.u32 %v1118, 16
      %v1312 = vrot.slane %v1310, 4
      %v1313 = vor.u32 %v1312, %v1308
      %v1314 = vrot.slane %v1313, 4
      %v1316 = vshll.u32 %v1119, 16
      %v1318 = vrot.slane %v1316, 5
      %v1319 = vsel %vm226, %v1314, %v1318
      %v1321 = vshrl.u32 %v1120, 16
      %v1323 = vrot.slane %v1321, 4
      %v1324 = vshll.u32 %v1120, 16
      %v1326 = vrot.slane %v1324, 5
      %v1327 = vor.u32 %v1323, %v1326
      %v1328 = vrot.slane %v1327, 4
      %v1330 = vshll.u32 %v1121, 16
      %v1332 = vrot.slane %v1330, 5
      %v1333 = vsel %vm226, %v1328, %v1332
      %v1334 = vshrl.u32 %v1121, 16
      %v1336 = vrot.slane %v1334, 4
      %v1337 = vor.u32 %v1336, %v1332
      %v1338 = vrot.slane %v1337, 4
      %v1340 = vshll.u32 %v1122, 16
      %v1342 = vrot.slane %v1340, 5
      %v1343 = vsel %vm226, %v1338, %v1342
      %v1345 = vshrl.u32 %v1123, 16
      %v1347 = vrot.slane %v1345, 4
      %v1348 = vshll.u32 %v1123, 16
      %v1350 = vrot.slane %v1348, 5
      %v1351 = vor.u32 %v1347, %v1350
      %v1352 = vrot.slane %v1351, 4
      %v1354 = vshll.u32 %v1124, 16
      %v1356 = vrot.slane %v1354, 5
      %v1357 = vsel %vm226, %v1352, %v1356
      %v1358 = vshrl.u32 %v1124, 16
      %v1360 = vrot.slane %v1358, 4
      %v1361 = vor.u32 %v1360, %v1356
      %v1362 = vrot.slane %v1361, 4
      %v1364 = vshll.u32 %v1125, 16
      %v1366 = vrot.slane %v1364, 5
      %v1367 = vsel %vm226, %v1362, %v1366
      %v1369 = vshrl.u32 %v1126, 16
      %v1371 = vrot.slane %v1369, 4
      %v1372 = vshll.u32 %v1126, 16
      %v1374 = vrot.slane %v1372, 5
      %v1375 = vor.u32 %v1371, %v1374
      %v1376 = vrot.slane %v1375, 4
      %v1378 = vshll.u32 %v1127, 16
      %v1380 = vrot.slane %v1378, 5
      %v1381 = vsel %vm226, %v1376, %v1380
      %v1382 = vshrl.u32 %v1127, 16
      %v1384 = vrot.slane %v1382, 4
      %v1385 = vor.u32 %v1384, %v1380
      %v1386 = vrot.slane %v1385, 4
      %v1388 = vshll.u32 %v1128, 16
      %v1390 = vrot.slane %v1388, 5
      %v1391 = vsel %vm226, %v1386, %v1390
      %v1393 = vshrl.u32 %v1129, 16
      %v1395 = vrot.slane %v1393, 4
      %v1396 = vshll.u32 %v1129, 16
      %v1398 = vrot.slane %v1396, 5
      %v1399 = vor.u32 %v1395, %v1398
      %v1400 = vrot.slane %v1399, 4
      %v1402 = vshll.u32 %v1130, 16
      %v1404 = vrot.slane %v1402, 5
      %v1405 = vsel %vm226, %v1400, %v1404
      %v1406 = vshrl.u32 %v1130, 16
      %v1408 = vrot.slane %v1406, 4
      %v1409 = vor.u32 %v1408, %v1404
      %v1410 = vrot.slane %v1409, 4
      %v1412 = vshll.u32 %v1131, 16
      %v1414 = vrot.slane %v1412, 5
      %v1415 = vsel %vm226, %v1410, %v1414
      %v1417 = vshrl.u32 %v1132, 16
      %v1419 = vrot.slane %v1417, 4
      %v1420 = vshll.u32 %v1132, 16
      %v1422 = vrot.slane %v1420, 5
      %v1423 = vor.u32 %v1419, %v1422
      %v1424 = vrot.slane %v1423, 4
      %v1426 = vshll.u32 %v1133, 16
      %v1428 = vrot.slane %v1426, 5
      %v1429 = vsel %vm226, %v1424, %v1428
      %v1430 = vshrl.u32 %v1133, 16
      %v1432 = vrot.slane %v1430, 4
      %v1433 = vor.u32 %v1432, %v1428
      %v1434 = vrot.slane %v1433, 4
      %v1436 = vshll.u32 %v1134, 16
      %v1438 = vrot.slane %v1436, 5
      %v1439 = vsel %vm226, %v1434, %v1438
      %v1441 = vshrl.u32 %v1135, 16
      %v1443 = vrot.slane %v1441, 4
      %v1444 = vshll.u32 %v1135, 16
      %v1446 = vrot.slane %v1444, 5
      %v1447 = vor.u32 %v1443, %v1446
      %v1448 = vrot.slane %v1447, 4
      %v1450 = vshll.u32 %v1136, 16
      %v1452 = vrot.slane %v1450, 5
      %v1453 = vsel %vm226, %v1448, %v1452
      %v1454 = vshrl.u32 %v1136, 16
      %v1456 = vrot.slane %v1454, 4
      %v1457 = vor.u32 %v1456, %v1452
      %v1458 = vrot.slane %v1457, 4
      %v1460 = vshll.u32 %v1137, 16
      %v1462 = vrot.slane %v1460, 5
      %v1463 = vsel %vm226, %v1458, %v1462
      %s1464 = scalar_lea.vmem %s1, 20
      %v1465 = vld [vmem:[%s1464] sm:$0xf]
      %v1466 = vunpack.c.l.b16 %v1285
      %v1467 = vunpack.c.l.b16 %v1295
      %v1468 = vunpack.c.l.b16 %v1309
      %v1469 = vunpack.c.l.b16 %v1319
      %v1470 = vunpack.c.l.b16 %v1333
      %v1471 = vunpack.c.l.b16 %v1343
      %v1472 = vunpack.c.l.b16 %v1357
      %v1473 = vunpack.c.l.b16 %v1367
      %v1474 = vunpack.c.l.b16 %v1381
      %v1475 = vunpack.c.l.b16 %v1391
      %v1476 = vunpack.c.l.b16 %v1405
      %v1477 = vunpack.c.l.b16 %v1415
      %v1478 = vunpack.c.l.b16 %v1429
      %v1479 = vunpack.c.l.b16 %v1439
      %v1480 = vunpack.c.l.b16 %v1453
      %v1481 = vunpack.c.l.b16 %v1463
      %v1482 = vpack.c.b16 %v1467, %v1466
      %v1483 = vpack.c.b16 %v1469, %v1468
      %v1484 = vpack.c.b16 %v1471, %v1470
      %v1485 = vpack.c.b16 %v1473, %v1472
      %v1486 = vpack.c.b16 %v1475, %v1474
      %v1487 = vpack.c.b16 %v1477, %v1476
      %v1488 = vpack.c.b16 %v1479, %v1478
      %v1489 = vpack.c.b16 %v1481, %v1480
      %v1491 = vsel %vm445, %v1482, 0
      %v1494 = vsel %vm445, %v1483, 0
      %v1497 = vsel %vm445, %v1484, 0
      %v1500 = vsel %vm445, %v1485, 0
      %v1503 = vsel %vm445, %v1486, 0
      %v1506 = vsel %vm445, %v1487, 0
      %v1509 = vsel %vm445, %v1488, 0
      %v1512 = vsel %vm445, %v1489, 0
      %v1515 = vsel %vm470, %v1465, 0
      %1517 = vmatpush.bf16.msra.mxu0 0
      %1518 = vmatpush.bf16.msra.mxu0 0
      %1519 = vmatpush.bf16.msra.mxu0 0
      %1520 = vmatpush.bf16.msra.mxu0 0
      %1521 = vmatpush.bf16.msra.mxu0 0
      %1522 = vmatpush.bf16.msra.mxu0 0
      %1523 = vmatpush.bf16.msra.mxu0 0
      %1524 = vmatpush.bf16.msra.mxu0 %v1515
      %1525 = vmatmul.bf16.gmra.mxu0 %v1491
      %v1526 = vpop.f32.mrf.mxu0
      %v1527 = vadd.f32 0.0, %v1526
      %v1528 = vpop.f32.mrf.mxu0
      %v1529 = vadd.f32 0.0, %v1528
      %1530 = vmatmul.bf16.gmra.mxu0 %v1494
      %v1531 = vpop.f32.mrf.mxu0
      %v1532 = vadd.f32 0.0, %v1531
      %v1533 = vpop.f32.mrf.mxu0
      %v1534 = vadd.f32 0.0, %v1533
      %1535 = vmatmul.bf16.gmra.mxu0 %v1497
      %v1536 = vpop.f32.mrf.mxu0
      %v1537 = vadd.f32 0.0, %v1536
      %v1538 = vpop.f32.mrf.mxu0
      %v1539 = vadd.f32 0.0, %v1538
      %1540 = vmatmul.bf16.gmra.mxu0 %v1500
      %v1541 = vpop.f32.mrf.mxu0
      %v1542 = vadd.f32 0.0, %v1541
      %v1543 = vpop.f32.mrf.mxu0
      %v1544 = vadd.f32 0.0, %v1543
      %1545 = vmatmul.bf16.gmra.mxu0 %v1503
      %v1546 = vpop.f32.mrf.mxu0
      %v1547 = vadd.f32 0.0, %v1546
      %v1548 = vpop.f32.mrf.mxu0
      %v1549 = vadd.f32 0.0, %v1548
      %1550 = vmatmul.bf16.gmra.mxu0 %v1506
      %v1551 = vpop.f32.mrf.mxu0
      %v1552 = vadd.f32 0.0, %v1551
      %v1553 = vpop.f32.mrf.mxu0
      %v1554 = vadd.f32 0.0, %v1553
      %1555 = vmatmul.bf16.gmra.mxu0 %v1509
      %v1556 = vpop.f32.mrf.mxu0
      %v1557 = vadd.f32 0.0, %v1556
      %v1558 = vpop.f32.mrf.mxu0
      %v1559 = vadd.f32 0.0, %v1558
      %1560 = vmatmul.bf16.gmra.mxu0 %v1512
      %v1561 = vpop.f32.mrf.mxu0
      %v1562 = vadd.f32 0.0, %v1561
      %v1563 = vpop.f32.mrf.mxu0
      %v1564 = vadd.f32 0.0, %v1563
      %1565 = vdwg.mxu0
      %v1566 = vadd.f32 %v1256, %v1527
      %v1567 = vadd.f32 %v1257, %v1529
      %v1568 = vadd.f32 %v1258, %v1532
      %v1569 = vadd.f32 %v1259, %v1534
      %v1570 = vadd.f32 %v1260, %v1537
      %v1571 = vadd.f32 %v1261, %v1539
      %v1572 = vadd.f32 %v1262, %v1542
      %v1573 = vadd.f32 %v1263, %v1544
      %v1574 = vadd.f32 %v1264, %v1547
      %v1575 = vadd.f32 %v1265, %v1549
      %v1576 = vadd.f32 %v1266, %v1552
      %v1577 = vadd.f32 %v1267, %v1554
      %v1578 = vadd.f32 %v1268, %v1557
      %v1579 = vadd.f32 %v1269, %v1559
      %v1580 = vadd.f32 %v1270, %v1562
      %v1581 = vadd.f32 %v1271, %v1564
      %v1582 = vld [vmem:[%s2] sm:$0x1]
      %v1584 = vperm.slane %v1582, 0
      %v1586 = vadd.f32 %v1566, %v1584
      %v1587 = vadd.f32 %v1567, %v1584
      %v1588 = vadd.f32 %v1568, %v1584
      %v1589 = vadd.f32 %v1569, %v1584
      %v1590 = vadd.f32 %v1570, %v1584
      %v1591 = vadd.f32 %v1571, %v1584
      %v1592 = vadd.f32 %v1572, %v1584
      %v1593 = vadd.f32 %v1573, %v1584
      %v1594 = vadd.f32 %v1574, %v1584
      %v1595 = vadd.f32 %v1575, %v1584
      %v1596 = vadd.f32 %v1576, %v1584
      %v1597 = vadd.f32 %v1577, %v1584
      %v1598 = vadd.f32 %v1578, %v1584
      %v1599 = vadd.f32 %v1579, %v1584
      %v1600 = vadd.f32 %v1580, %v1584
      %v1601 = vadd.f32 %v1581, %v1584
      %vm1602 = vcmp.ge.f32.partialorder %v1586, 0.0
      %vm1603 = vcmp.ge.f32.partialorder %v1587, 0.0
      %vm1604 = vcmp.ge.f32.partialorder %v1588, 0.0
      %vm1605 = vcmp.ge.f32.partialorder %v1589, 0.0
      %vm1606 = vcmp.ge.f32.partialorder %v1590, 0.0
      %vm1607 = vcmp.ge.f32.partialorder %v1591, 0.0
      %vm1608 = vcmp.ge.f32.partialorder %v1592, 0.0
      %vm1609 = vcmp.ge.f32.partialorder %v1593, 0.0
      %vm1610 = vcmp.ge.f32.partialorder %v1594, 0.0
      %vm1611 = vcmp.ge.f32.partialorder %v1595, 0.0
      %vm1612 = vcmp.ge.f32.partialorder %v1596, 0.0
      %vm1613 = vcmp.ge.f32.partialorder %v1597, 0.0
      %vm1614 = vcmp.ge.f32.partialorder %v1598, 0.0
      %vm1615 = vcmp.ge.f32.partialorder %v1599, 0.0
      %vm1616 = vcmp.ge.f32.partialorder %v1600, 0.0
      %vm1617 = vcmp.ge.f32.partialorder %v1601, 0.0
      %v1618 = vmul.f32 %v1586, 0.2
      %v1619 = vmul.f32 %v1587, 0.2
      %v1620 = vmul.f32 %v1588, 0.2
      %v1621 = vmul.f32 %v1589, 0.2
      %v1622 = vmul.f32 %v1590, 0.2
      %v1623 = vmul.f32 %v1591, 0.2
      %v1624 = vmul.f32 %v1592, 0.2
      %v1625 = vmul.f32 %v1593, 0.2
      %v1626 = vmul.f32 %v1594, 0.2
      %v1627 = vmul.f32 %v1595, 0.2
      %v1628 = vmul.f32 %v1596, 0.2
      %v1629 = vmul.f32 %v1597, 0.2
      %v1630 = vmul.f32 %v1598, 0.2
      %v1631 = vmul.f32 %v1599, 0.2
      %v1632 = vmul.f32 %v1600, 0.2
      %v1633 = vmul.f32 %v1601, 0.2
      %v1634 = vsel %vm1602, %v1586, %v1618
      %v1635 = vsel %vm1603, %v1587, %v1619
      %v1636 = vsel %vm1604, %v1588, %v1620
      %v1637 = vsel %vm1605, %v1589, %v1621
      %v1638 = vsel %vm1606, %v1590, %v1622
      %v1639 = vsel %vm1607, %v1591, %v1623
      %v1640 = vsel %vm1608, %v1592, %v1624
      %v1641 = vsel %vm1609, %v1593, %v1625
      %v1642 = vsel %vm1610, %v1594, %v1626
      %v1643 = vsel %vm1611, %v1595, %v1627
      %v1644 = vsel %vm1612, %v1596, %v1628
      %v1645 = vsel %vm1613, %v1597, %v1629
      %v1646 = vsel %vm1614, %v1598, %v1630
      %v1647 = vsel %vm1615, %v1599, %v1631
      %v1648 = vsel %vm1616, %v1600, %v1632
      %v1649 = vsel %vm1617, %v1601, %v1633
      %1650 = vst.msk [vmem:[%s192] sm:$0xff] %vm445, %v1634
      %1651 = vst.msk [vmem:[%s192 + $0x8] sm:$0xff] %vm445, %v1635
      %1652 = vst.msk [vmem:[%s192 + $0x10] sm:$0xff] %vm445, %v1636
      %1653 = vst.msk [vmem:[%s192 + $0x18] sm:$0xff] %vm445, %v1637
      %1654 = vst.msk [vmem:[%s192 + $0x20] sm:$0xff] %vm445, %v1638
      %1655 = vst.msk [vmem:[%s192 + $0x28] sm:$0xff] %vm445, %v1639
      %1656 = vst.msk [vmem:[%s192 + $0x30] sm:$0xff] %vm445, %v1640
      %1657 = vst.msk [vmem:[%s192 + $0x38] sm:$0xff] %vm445, %v1641
      %1658 = vst.msk [vmem:[%s192 + $0x40] sm:$0xff] %vm445, %v1642
      %1659 = vst.msk [vmem:[%s192 + $0x48] sm:$0xff] %vm445, %v1643
      %1660 = vst.msk [vmem:[%s192 + $0x50] sm:$0xff] %vm445, %v1644
      %1661 = vst.msk [vmem:[%s192 + $0x58] sm:$0xff] %vm445, %v1645
      %1662 = vst.msk [vmem:[%s192 + $0x60] sm:$0xff] %vm445, %v1646
      %1663 = vst.msk [vmem:[%s192 + $0x68] sm:$0xff] %vm445, %v1647
      %1664 = vst.msk [vmem:[%s192 + $0x70] sm:$0xff] %vm445, %v1648
      %1665 = vst.msk [vmem:[%s192 + $0x78] sm:$0xff] %vm445, %v1649
      %s1666 = smul.u32 16, %s19
      %p1667 = scmp.lt.s32.totalorder %s18, 1
      %s1668 = scalar_select %p1667, %s18, 1
      %p1669 = scmp.lt.s32.totalorder %s1666, 15
      %s1670 = scalar_select %p1669, %s1666, 15
      %s1671 = smul.addr %s1668, 16
      %s1672 = sadd.s32 %s1670, %s1671
      %s1673 = smul.addr %s1672, 8
      %s1674 = scalar_lea.vmem %s3, %s1673
      // Predicated region
      $region33: #{tpu_custom_call.1} parent=31 // pred_check
        %p1675 = pneg %p114
      $region34: #{tpu_custom_call.1} parent=31 // pred_check_branch
        %1677 = sbr.rel (%p1675) target = $region36
      $region35: #{tpu_custom_call.1} parent=31 // pred_region
        %s1678 = smul.u32 16, %s19
      $region36: #{tpu_custom_call.1} parent=31 // pred_fallthru
        _
    $region32: #{tpu_custom_call.1} parent=5 // pred_fallthru
      _
    %p1679 = scmp.le.s32.totalorder 2, %s9
    // Predicated region
    $region37: #{tpu_custom_call.1} parent=5 // pred_check
      %p1680 = pneg %p1679
    $region38: #{tpu_custom_call.1} parent=5 // pred_check_branch
      %1682 = sbr.rel (%p1680) target = $region40
    $region39: #{tpu_custom_call.1} parent=5 // pred_region
      %s1683 = ssub.s32 %s9, 2
      // Predicated region
      $region41: #{tpu_custom_call.1} parent=39 // pred_check
        %p1684 = pneg %p120
      $region42: #{tpu_custom_call.1} parent=39 // pred_check_branch
        %1686 = sbr.rel (%p1684) target = $region44
      $region43: #{tpu_custom_call.1} parent=39 // pred_region
        %s1687 = smul.u32 16, %s21
        %p1688 = scmp.lt.s32.totalorder %s20, 1
        %s1689 = scalar_select %p1688, %s20, 1
        %p1690 = scmp.lt.s32.totalorder %s1687, 15
        %s1691 = scalar_select %p1690, %s1687, 15
        %s1692 = smul.addr %s1689, 16
        %s1693 = sadd.s32 %s1691, %s1692
        %s1694 = smul.addr %s1693, 8
        %s1695 = scalar_lea.vmem %s3, %s1694
      $region44: #{tpu_custom_call.1} parent=39 // pred_fallthru
        _
    $region40: #{tpu_custom_call.1} parent=5 // pred_fallthru
      _
  $region6: #{tpu_custom_call.1} parent=0 // loop_footer
    %s13 = sadd.s32 1, %s9
  $region7: #{tpu_custom_call.1} parent=0 // loop_footer_branch
    %8 = sbr.rel target = $region3
  $region8: #{tpu_custom_call.1} parent=0 // loop_exit
    _

</llo_original>
